<compile_context>
chip_gen: v6e
topology: v6e:2x2x1
jax: 0.10.0
libtpu: 0.0.40
codegen_flags: <defaults>
</compile_context>

<pallas_src>
import functools
import numpy as np

import jax
import jax.numpy as jnp
from jax import lax
from jax.experimental import pallas as pl
from jax.experimental.pallas import tpu as pltpu


# ----------------------------------------------------------------------------
# small helpers
# ----------------------------------------------------------------------------
def _bdot(a, b):
    """bf16 operands, f32 accumulation (MXU-friendly)."""
    return jnp.dot(a.astype(jnp.bfloat16), b.astype(jnp.bfloat16),
                   preferred_element_type=jnp.float32)


def _full(shape):
    """BlockSpec covering a whole array for grid=(1,) kernels."""
    n = len(shape)
    return pl.BlockSpec(shape, lambda i, _n=n: (0,) * _n)


def _init(key, shape, scale=0.1):
    return scale * jax.random.normal(key, shape, dtype=jnp.float32)


def _cparams(shapes, sem=None):
    """Explicit scoped-VMEM limit sized (roughly) from the buffers actually used."""
    nbytes = sum(int(np.prod(s)) * 4 for s in shapes)
    lim = int(min(32 * 2**20, max(8 * 2**20, 3 * nbytes)))
    return pltpu.CompilerParams(dimension_semantics=sem, vmem_limit_bytes=lim)


def _gather_rows(gx_ref, t, B):
    """[B, width] slab for timestep t from a batch-major [B, T, width] ref (dynamic sublane ds)."""
    rows = [gx_ref[b, pl.ds(t, 1), :] for b in range(B)]
    return rows[0] if len(rows) == 1 else jnp.concatenate(rows, axis=0)


# ----------------------------------------------------------------------------
# Kernel A: fused FSMN stack + hoisted, lane-dense BiLSTM input projection
#           (grid=(2,) = pitch/energy, "parallel" -> 2nd TensorCore on v7x)
# ----------------------------------------------------------------------------
def make_fsmn_proj_kernel(nl, K, lp, T, B):
    def kernel(*refs):
        x_ref = refs[0]
        lrefs = refs[1:1 + 4 * nl]
        wih_ref, bl_ref = refs[1 + 4 * nl], refs[2 + 4 * nl]
        gx_ref = refs[3 + 4 * nl]

        N = B * T
        tcol = lax.broadcasted_iota(jnp.int32, (N, 1), 0) % T     # time index of each flat row
        h = x_ref[...]                                            # [B*T, d0] (batch-major rows)
        for l in range(nl):
            w1_ref, b1_ref, w2_ref, mw_ref = lrefs[4 * l:4 * l + 4]
            d = h.shape[-1]
            # FeedForwardNet (1x1 convs == linears): relu(w1) -> w2 (no bias)
            z = jnp.maximum(_bdot(h, w1_ref[...]) + b1_ref[...], 0.0)
            ctx = _bdot(z, w2_ref[...])                           # [B*T, M]
            # Depthwise FSMN memory block (MemoryBlockV2): K taps over time via XLU rolls + masks
            mem = ctx
            for k in range(K):
                s = lp - k                                        # tap[t] = ctx[t - s]
                if s == 0:
                    tap = ctx
                else:
                    tap = pltpu.roll(ctx, shift=s % N, axis=0)
                    mask = (tcol >= s) if s > 0 else (tcol < T + s)
                    tap = jnp.where(mask, tap, 0.0)
                mem = mem + tap * mw_ref[k]
            if mem.shape[-1] == d:                                # outer residual when dims match
                mem = mem + h
            h = mem
        # hoisted BiLSTM input projections: fw|bw concatenated -> one 128-lane matmul + one
        # unmasked full-width store (biases = b_ih + b_hh pre-summed)
        gx = _bdot(h, wih_ref[...]) + bl_ref[...]                 # [B*T, 2G]
        gx_ref[...] = gx.reshape(B, T, -1)
    return kernel


# ----------------------------------------------------------------------------
# Kernel B: fused fw+bw LSTM recurrence + in-scan FC(2H -> 1) head (grid=(2,))
# ----------------------------------------------------------------------------
def _lstm_cell(gates, c_prev, H):
    i_g = jax.nn.sigmoid(gates[:, 0:H])
    f_g = jax.nn.sigmoid(gates[:, H:2 * H])
    g_g = jnp.tanh(gates[:, 2 * H:3 * H])
    o_g = jax.nn.sigmoid(gates[:, 3 * H:4 * H])
    c = f_g * c_prev + i_g * g_g
    return o_g * jnp.tanh(c), c


def _bilstm_head_kernel(gx_ref, whh_ref, fcw_ref, fcb_ref, o_ref, *, T, B, H):
    G = 4 * H
    whh_f = whh_ref[0]
    whh_b = whh_ref[1]
    wf = fcw_ref[:, 0:H]
    wb = fcw_ref[:, H:2 * H]
    lane_t = lax.broadcasted_iota(jnp.int32, (1, T), 1)

    def step(i, carry):
        hf, cf, hb, cb, y = carry
        tf = i
        tb = T - 1 - i
        gxf = _gather_rows(gx_ref, tf, B)[:, 0:G]
        gxb = _gather_rows(gx_ref, tb, B)[:, G:2 * G]
        # the two directions are independent -> their recurrent dots issue back-to-back and
        # overlap in the MXU pipeline (single serial critical path instead of two scans)
        gates_f = gxf + jnp.dot(hf, whh_f, preferred_element_type=jnp.float32)
        gates_b = gxb + jnp.dot(hb, whh_b, preferred_element_type=jnp.float32)
        hf, cf = _lstm_cell(gates_f, cf, H)
        hb, cb = _lstm_cell(gates_b, cb, H)
        # FC head accumulated in-scan (rides idle VPU/XLU slots); output is lane-dense [B, T]
        y = (y
             + jnp.where(lane_t == tf, (hf * wf).sum(-1, keepdims=True), 0.0)
             + jnp.where(lane_t == tb, (hb * wb).sum(-1, keepdims=True), 0.0))
        return hf, cf, hb, cb, y

    z = jnp.zeros((B, H), jnp.float32)
    carry = (z, z, z, z, jnp.zeros((B, T), jnp.float32))
    # TODO(synk): bound the unroll (e.g. 8) and T-chunk behind an "arbitrary" grid axis at production T.
    carry = lax.fori_loop(0, T, step, carry, unroll=True)
    o_ref[...] = carry[4] + fcb_ref[...]


def _lstm_head_kernel(gx_ref, whh_ref, fcw_ref, fcb_ref, o_ref, *, T, B, H):
    whh = whh_ref[...]
    fcw = fcw_ref[...]
    lane_t = lax.broadcasted_iota(jnp.int32, (1, T), 1)

    def step(t, carry):
        h, c, y = carry
        gates = _gather_rows(gx_ref, t, B) + jnp.dot(h, whh, preferred_element_type=jnp.float32)
        h, c = _lstm_cell(gates, c, H)
        y = y + jnp.where(lane_t == t, (h * fcw).sum(-1, keepdims=True), 0.0)
        return h, c, y

    z = jnp.zeros((B, H), jnp.float32)
    _, _, y = lax.fori_loop(0, T, step, (z, z, jnp.zeros((B, T), jnp.float32)), unroll=True)
    o_ref[...] = y + fcb_ref[...]


# ----------------------------------------------------------------------------
# Kernel E: pitch/energy Conv1d(k=9, pad=4) embeddings + residual add -> text_aug
#           (9 shifted broadcast-FMAs per signal; no im2col, no K=9 matmul)
# ----------------------------------------------------------------------------
def _emb_aug_kernel(p_ref, e_ref, wp_ref, bp_ref, we_ref, be_ref, txt_ref, o_ref, *, B, T):
    N = B * T
    acc = txt_ref[...] + bp_ref[...] + be_ref[...]
    tcol = lax.broadcasted_iota(jnp.int32, (N, 1), 0) % T
    p = p_ref[...]
    e = e_ref[...]
    for k in range(9):
        s = 4 - k                                           # tap[t] = x[t - s] = x[t + k - 4]
        if s == 0:
            tp, te = p, e
        else:
            tp = pltpu.roll(p, shift=s % N, axis=0)
            te = pltpu.roll(e, shift=s % N, axis=0)
            mask = (tcol >= s) if s > 0 else (tcol < T + s)
            tp = jnp.where(mask, tp, 0.0)
            te = jnp.where(mask, te, 0.0)
        acc = acc + tp * wp_ref[k] + te * we_ref[k]
    o_ref[...] = acc


# ----------------------------------------------------------------------------
# Kernel D1: duration predictor prenet + hoisted LSTM input projection
# (cond concat avoided by splitting W_ih across [prenet, text_aug, spk, emo] chunks)
# ----------------------------------------------------------------------------
def _dur_prenet_kernel(dur_ref, txt_ref, spk_ref, emo_ref,
                       pw1_ref, pb1_ref, pw2_ref, pb2_ref,
                       wx_ref, wt_ref, ws_ref, we_ref, bl_ref,
                       gx_ref, *, B, T):
    d3 = dur_ref[...]                                                   # [B, T, 1]
    h1 = jnp.maximum(d3 * pw1_ref[...] + pb1_ref[...], 0.0)             # [B, T, P0]
    h1f = h1.reshape(B * T, h1.shape[-1])
    h2 = jnp.maximum(_bdot(h1f, pw2_ref[...]) + pb2_ref[...], 0.0)      # [B*T, P1]
    gx = (_bdot(h2, wx_ref[...]) + _bdot(txt_ref[...], wt_ref[...])
          + _bdot(spk_ref[...], ws_ref[...]) + _bdot(emo_ref[...], we_ref[...])
          + bl_ref[...])                                                 # [B*T, G], G = 128
    gx_ref[...] = gx.reshape(B, T, -1)


# ----------------------------------------------------------------------------
# Kernel LR: fused length-regulator bmm (text_aug|emo|spk channels) + sinusoid PE epilogue
# ----------------------------------------------------------------------------
def _lr_pe_kernel(pos_ref, invf_ref, m_ref, x_ref, o_ref, *, enc):
    y = jnp.dot(m_ref[0].astype(jnp.bfloat16), x_ref[0].astype(jnp.bfloat16),
                preferred_element_type=jnp.float32)                 # [L, D]
    pos = pos_ref[0]                                                # [L, 1]
    ang = pos * invf_ref[...]                                       # [L, enc//2]
    pe = jnp.concatenate([jnp.sin(ang), jnp.cos(ang)], axis=-1)     # sin | cos halves
    pe = jnp.where(pos > 0.0, pe, 0.0)
    L, D = y.shape
    pe_full = jnp.concatenate([pe, jnp.zeros((L, D - enc), jnp.float32)], axis=-1)
    o_ref[0] = y + pe_full
    # TODO(synk): at production L/T use a scalar-prefetch gather LR (per-frame phone index) and
    # pad the channel dim to 128 instead of the dense [L,T] bmm with a 64-wide output.


def length_regulate_fused(align, lr_in, pos, inv_freq, enc):
    B, L, T = align.shape
    D = lr_in.shape[-1]
    half = inv_freq.shape[-1]
    return pl.pallas_call(
        functools.partial(_lr_pe_kernel, enc=enc),
        out_shape=jax.ShapeDtypeStruct((B, L, D), jnp.float32),
        grid=(B,),
        in_specs=[pl.BlockSpec((1, L, 1), lambda b: (b, 0, 0)),
                  pl.BlockSpec((1, half), lambda b: (0, 0)),
                  pl.BlockSpec((1, L, T), lambda b: (b, 0, 0)),
                  pl.BlockSpec((1, T, D), lambda b: (b, 0, 0))],
        out_specs=pl.BlockSpec((1, L, D), lambda b: (b, 0, 0)),
        compiler_params=_cparams([(L, 1), (1, half), (L, T), (T, D), (L, D)], ("parallel",)),
    )(pos, inv_freq, align, lr_in)


# ----------------------------------------------------------------------------
# Sub-module wrappers
# ----------------------------------------------------------------------------
def fsmn_predictors_fused(sp, x_flat, cfg, B, T):
    """Pitch + energy VarFsmnRnnNARPredictor in two fused pallas_calls (grid=(2,), parallel)."""
    Din = x_flat.shape[-1]
    K = cfg["predictor_filter_size"]
    shift = cfg["predictor_shift"]
    lp = int(round((K - 1) / 2)) + shift
    M = cfg["predictor_num_memory_units"]
    F_ = cfg["predictor_ffn_inner_dim"]
    nl = cfg["predictor_fsmn_num_layers"]
    H = cfg["predictor_lstm_units"] // 2
    G = 4 * H
    assert max(lp, K - 1 - lp) < T, "FSMN conv taps must not span more than one window of T"

    # ---- kernel A: FSMN stack + lane-dense (2G = 128) gate pre-activations ----
    in_specs = [pl.BlockSpec((B * T, Din), lambda p: (0, 0))]
    args = [x_flat]
    shapes = [(B * T, Din), (B, T, 2 * G), (B, T, 2 * G)]
    d = Din
    for l in range(nl):
        in_specs += [pl.BlockSpec((None, d, F_), lambda p: (p, 0, 0)),
                     pl.BlockSpec((None, 1, F_), lambda p: (p, 0, 0)),
                     pl.BlockSpec((None, F_, M), lambda p: (p, 0, 0)),
                     pl.BlockSpec((None, K, M), lambda p: (p, 0, 0))]
        args += [sp["w1"][l], sp["b1"][l], sp["w2"][l], sp["mem_w"][l]]
        shapes += [(d, F_), (1, F_), (F_, M), (K, M), (B * T, F_), (B * T, M)]
        d = M
    in_specs += [pl.BlockSpec((None, M, 2 * G), lambda p: (p, 0, 0)),
                 pl.BlockSpec((None, 1, 2 * G), lambda p: (p, 0, 0))]
    args += [sp["wih"], sp["bl"]]
    shapes += [(M, 2 * G), (1, 2 * G)]

    gx = pl.pallas_call(
        make_fsmn_proj_kernel(nl, K, lp, T, B),
        out_shape=jax.ShapeDtypeStruct((2, B, T, 2 * G), jnp.float32),
        grid=(2,),
        in_specs=in_specs,
        out_specs=pl.BlockSpec((None, B, T, 2 * G), lambda p: (p, 0, 0, 0)),
        compiler_params=_cparams(shapes, ("parallel",)),
    )(*args)

    # ---- kernel B: fused fw+bw recurrence + FC head, lane-dense [2, B, T] output ----
    preds = pl.pallas_call(
        functools.partial(_bilstm_head_kernel, T=T, B=B, H=H),
        out_shape=jax.ShapeDtypeStruct((2, B, T), jnp.float32),
        grid=(2,),
        in_specs=[pl.BlockSpec((None, B, T, 2 * G), lambda p: (p, 0, 0, 0)),
                  pl.BlockSpec((None, 2, H, G), lambda p: (p, 0, 0, 0)),
                  pl.BlockSpec((None, 1, 2 * H), lambda p: (p, 0, 0)),
                  pl.BlockSpec((None, 1, 1), lambda p: (p, 0, 0))],
        out_specs=pl.BlockSpec((None, B, T), lambda p: (p, 0, 0)),
        compiler_params=_cparams([(B, T, 2 * G), (2, H, G), (1, 2 * H), (1, 1), (B, T)],
                                 ("parallel",)),
    )(gx, sp["whh"], sp["fc_w"], sp["fc_b"])

    return preds[0], preds[1]                       # [B, T] each, no external transposes


def dur_predictor_fused(dp, dur_in, text_aug_flat, spk_flat, emo_flat, B, T):
    """VarRnnARPredictor teacher-forcing forward (prenet -> LSTM -> FC), fused."""
    H = dp["whh"].shape[0]
    G = 4 * H
    C = text_aug_flat.shape[-1]
    S = spk_flat.shape[-1]
    E = emo_flat.shape[-1]
    P0 = dp["pw1"].shape[-1]
    P1 = dp["pw2"].shape[-1]

    gx = pl.pallas_call(
        functools.partial(_dur_prenet_kernel, B=B, T=T),
        out_shape=jax.ShapeDtypeStruct((B, T, G), jnp.float32),
        grid=(1,),
        in_specs=[_full((B, T, 1)), _full((B * T, C)), _full((B * T, S)), _full((B * T, E)),
                  _full((1, P0)), _full((1, P0)), _full((P0, P1)), _full((1, P1)),
                  _full((P1, G)), _full((C, G)), _full((S, G)), _full((E, G)), _full((1, G))],
        out_specs=_full((B, T, G)),
        compiler_params=_cparams([(B, T, 1), (B * T, C), (B * T, S), (B * T, E),
                                  (P0, P1), (P1, G), (C, G), (S, G), (E, G), (B, T, G)],
                                 ("arbitrary",)),
    )(dur_in, text_aug_flat, spk_flat, emo_flat,
      dp["pw1"], dp["pb1"], dp["pw2"], dp["pb2"],
      dp["wx"], dp["wt"], dp["ws"], dp["we"], dp["bl"])

    y = pl.pallas_call(
        functools.partial(_lstm_head_kernel, T=T, B=B, H=H),
        out_shape=jax.ShapeDtypeStruct((B, T), jnp.float32),
        grid=(1,),
        in_specs=[_full((B, T, G)), _full((H, G)), _full((1, H)), _full((1, 1))],
        out_specs=_full((B, T)),
        compiler_params=_cparams([(B, T, G), (H, G), (B, T)], ("arbitrary",)),
    )(gx, dp["whh"], dp["fcw"], dp["fcb"])
    return y                                        # [B, T]


def build_alignment(dur_np, L):
    """Length-regulator alignment matrix M[b, frame, phone] in {0,1} (host-side numpy)."""
    cum = np.cumsum(dur_np, axis=1)
    prev = cum - dur_np
    frames = np.arange(L)[None, :, None]
    align = (frames >= prev[:, None, :]) & (frames < cum[:, None, :])
    return jnp.asarray(align.astype(np.float32))


def dur_positions(dur_np, L):
    """Frame index within each phone (host-side; inputs are concrete targets)."""
    # TODO(synk): exact kantts DurSinusoidalPositionEncoder formula (interleave/scaling) not reproduced.
    B, T = dur_np.shape
    pos = np.zeros((B, L), dtype=np.float32)
    for b in range(B):
        idx = 0
        for t in range(T):
            d = int(dur_np[b, t])
            pos[b, idx:idx + d] = np.arange(1, d + 1, dtype=np.float32)
            idx += d
    return jnp.asarray(pos[:, :, None])             # [B, L, 1]


# ----------------------------------------------------------------------------
# Parameter construction (deterministic, synthetic)
# ----------------------------------------------------------------------------
def make_stacked_predictor_params(key, in_dim, cfg):
    """Pitch+energy predictor weights stacked on a leading dim of 2 for the grid=(2,) kernels.
    W_ih is fw|bw concatenated on the output dim (lane-dense 2G=128 gx); LSTM biases are a single
    combined vector (b_ih + b_hh pre-summed) — do the concat/sum when loading real checkpoints."""
    K = cfg["predictor_filter_size"]
    M = cfg["predictor_num_memory_units"]
    F_ = cfg["predictor_ffn_inner_dim"]
    nl = cfg["predictor_fsmn_num_layers"]
    H = cfg["predictor_lstm_units"] // 2
    G = 4 * H
    keys = iter(jax.random.split(key, nl * 3 + 6))
    p = {"w1": [], "b1": [], "w2": [], "mem_w": []}
    d = in_dim
    for _ in range(nl):
        p["w1"].append(_init(next(keys), (2, d, F_)))
        p["b1"].append(jnp.zeros((2, 1, F_), jnp.float32))
        p["w2"].append(_init(next(keys), (2, F_, M)))
        p["mem_w"].append(_init(next(keys), (2, K, M)))
        d = M
    p["wih"] = _init(next(keys), (2, M, 2 * G))
    p["bl"] = jnp.zeros((2, 1, 2 * G), jnp.float32)
    p["whh"] = _init(next(keys), (2, 2, H, G))      # [pitch/energy, fw/bw, H, 4H]
    p["fc_w"] = _init(next(keys), (2, 1, 2 * H))
    p["fc_b"] = jnp.zeros((2, 1, 1), jnp.float32)
    return p


def make_dur_params(key, enc, spk_u, emo_u, prenet_units, H):
    P0, P1 = prenet_units
    G = 4 * H
    keys = jax.random.split(key, 8)
    return dict(
        pw1=_init(keys[0], (1, P0)), pb1=jnp.zeros((1, P0), jnp.float32),
        pw2=_init(keys[1], (P0, P1)), pb2=jnp.zeros((1, P1), jnp.float32),
        # LSTM W_ih split over [prenet_out | text_aug | spk | emo] (cond concat order of kantts)
        wx=_init(keys[2], (P1, G)), wt=_init(keys[3], (enc, G)),
        ws=_init(keys[4], (spk_u, G)), we=_init(keys[5], (emo_u, G)),
        bl=jnp.zeros((1, G), jnp.float32),
        whh=_init(keys[6], (H, G)),
        fcw=_init(keys[7], (1, H)), fcb=jnp.zeros((1, 1), jnp.float32),
    )


def make_params(key, cfg):
    enc = cfg["encoder_projection_units"]
    emo_u = cfg["emotion_units"]
    spk_u = cfg["speaker_units"]
    in_dim = enc + emo_u + spk_u
    k = jax.random.split(key, 4)
    return dict(
        pred=make_stacked_predictor_params(k[0], in_dim, cfg),
        dur=make_dur_params(k[1], enc, spk_u, emo_u, cfg["dur_pred_prenet_units"],
                            cfg["dur_pred_lstm_units"]),
        pitch_emb_w=_init(k[2], (9, enc)), pitch_emb_b=jnp.zeros((1, enc), jnp.float32),
        energy_emb_w=_init(k[3], (9, enc)), energy_emb_b=jnp.zeros((1, enc), jnp.float32),
    )


# ----------------------------------------------------------------------------
# VarianceAdaptor forward (teacher forcing for duration; pitch/energy targets = None)
# ----------------------------------------------------------------------------
def variance_adaptor_forward(params, cfg, text, emo, spk, duration_targets_np):
    B, T, enc = text.shape
    assert T % 8 == 0, "in-kernel [B,T,*]<->[B*T,*] reshapes assume T is a multiple of 8"
    emo_u = emo.shape[-1]
    spk_u = spk.shape[-1]

    var_in_flat = jnp.concatenate([text, spk, emo], axis=-1).reshape(B * T, -1)

    # pitch + energy predictors, fused (grid=(2,) parallel; lane-dense outputs, no transposes)
    pitch_pred, energy_pred = fsmn_predictors_fused(params["pred"], var_in_flat, cfg, B, T)

    # Conv1d(k=9) pitch/energy embeddings + residual add -> text_aug (in-kernel shifted FMAs)
    text_flat = text.reshape(B * T, enc)
    pitch_col = pitch_pred.reshape(B * T, 1)
    energy_col = energy_pred.reshape(B * T, 1)
    text_aug_flat = pl.pallas_call(
        functools.partial(_emb_aug_kernel, B=B, T=T),
        out_shape=jax.ShapeDtypeStruct((B * T, enc), jnp.float32),
        grid=(1,),
        in_specs=[_full((B * T, 1)), _full((B * T, 1)),
                  _full((9, enc)), _full((1, enc)),
                  _full((9, enc)), _full((1, enc)),
                  _full((B * T, enc))],
        out_specs=_full((B * T, enc)),
        compiler_params=_cparams([(B * T, 1), (B * T, 1), (9, enc), (1, enc),
                                  (B * T, enc), (B * T, enc)], ("arbitrary",)),
    )(pitch_col, energy_col, params["pitch_emb_w"], params["pitch_emb_b"],
      params["energy_emb_w"], params["energy_emb_b"], text_flat)
    text_aug = text_aug_flat.reshape(B, T, enc)

    # teacher-forcing duration path
    go = jnp.zeros((B, 1), jnp.float32)
    dur_in = jnp.concatenate([go, jnp.asarray(duration_targets_np[:, :-1], jnp.float32)], axis=1)
    dur_in = jnp.log(dur_in + 1.0)[..., None]                  # [B, T, 1]
    spk_flat = spk.reshape(B * T, spk_u)
    emo_flat = emo.reshape(B * T, emo_u)
    log_dur_pred = dur_predictor_fused(params["dur"], dur_in, text_aug_flat,
                                       spk_flat, emo_flat, B, T)   # [B, T]

    # Length regulator: alignment built host-side from concrete targets; one fused bmm on TPU
    # with the DurSinusoidal position-encoding added in the same kernel's epilogue.
    r = cfg["outputs_per_step"]
    totals = duration_targets_np.sum(axis=1)
    lengths_rounded = (np.ceil(totals / r) * r).astype(np.int64)
    L = int(lengths_rounded.max())
    align = build_alignment(duration_targets_np, L)            # [B, L, T]
    pos = dur_positions(duration_targets_np, L)                # [B, L, 1]
    half = enc // 2
    inv_freq = jnp.asarray(
        (1.0 / (10000.0 ** (np.arange(half, dtype=np.float32) / half)))[None, :])
    lr_in = jnp.concatenate([text_aug, emo, spk], axis=-1)     # [B, T, enc+emo+spk]
    lr_all = length_regulate_fused(align, lr_in, pos, inv_freq, enc)  # [B, L, enc+emo+spk]
    LR_text = lr_all[:, :, :enc]
    LR_emo = lr_all[:, :, enc:enc + emo_u]
    LR_spk = lr_all[:, :, enc + emo_u:]
    LR_length_rounded = jnp.asarray(lengths_rounded, jnp.float32)

    return (LR_text, LR_emo, LR_spk, LR_length_rounded,
            log_dur_pred, pitch_pred, energy_pred)


# ----------------------------------------------------------------------------
# Main
# ----------------------------------------------------------------------------
if __name__ == "__main__":
    cfg = dict(
        encoder_projection_units=32,
        emotion_units=16,
        speaker_units=16,
        predictor_filter_size=5,
        predictor_fsmn_num_layers=2,
        predictor_num_memory_units=32,
        predictor_ffn_inner_dim=64,
        predictor_dropout=0.0,        # eval mode: dropout is identity
        predictor_shift=0,
        predictor_lstm_units=32,
        dur_pred_prenet_units=[32, 32],
        dur_pred_lstm_units=32,
        outputs_per_step=1,
    )

    B, T = 2, 8
    key = jax.random.PRNGKey(0)
    k_text, k_emo, k_spk, k_dur, k_par = jax.random.split(key, 5)

    text = jax.random.normal(k_text, (B, T, cfg["encoder_projection_units"]), dtype=jnp.float32)
    emo = jax.random.normal(k_emo, (B, T, cfg["emotion_units"]), dtype=jnp.float32)
    spk = jax.random.normal(k_spk, (B, T, cfg["speaker_units"]), dtype=jnp.float32)
    dur_targets = np.asarray(jax.random.randint(k_dur, (B, T), 1, 5), dtype=np.int64)

    params = make_params(k_par, cfg)

    outs = variance_adaptor_forward(params, cfg, text, emo, spk, dur_targets)
    outs = jax.block_until_ready(outs)

    LR_text, LR_emo, LR_spk, LR_len, log_dur, pitch, energy = outs
    assert LR_text.shape[0] == B and LR_text.shape[-1] == cfg["encoder_projection_units"]
    assert LR_emo.shape[-1] == cfg["emotion_units"] and LR_spk.shape[-1] == cfg["speaker_units"]
    assert log_dur.shape == (B, T) and pitch.shape == (B, T) and energy.shape == (B, T)
    for o in (LR_text, LR_emo, LR_spk, log_dur, pitch, energy):
        assert bool(jnp.all(jnp.isfinite(o)))

    print("KERNEL_OK")
</pallas_src>

<mosaic_0001>
module attributes {stable_mosaic.version = 11 : i64} {
  func.func @kernel(%arg0: i32, %arg1: memref<16x64xf32, #tpu.memory_space<vmem>>, %arg2: memref<1x64x64xf32, #tpu.memory_space<vmem>>, %arg3: memref<1x1x64xf32, #tpu.memory_space<vmem>>, %arg4: memref<1x64x32xf32, #tpu.memory_space<vmem>>, %arg5: memref<1x5x32xf32, #tpu.memory_space<vmem>>, %arg6: memref<1x32x64xf32, #tpu.memory_space<vmem>>, %arg7: memref<1x1x64xf32, #tpu.memory_space<vmem>>, %arg8: memref<1x64x32xf32, #tpu.memory_space<vmem>>, %arg9: memref<1x5x32xf32, #tpu.memory_space<vmem>>, %arg10: memref<1x32x128xf32, #tpu.memory_space<vmem>>, %arg11: memref<1x1x128xf32, #tpu.memory_space<vmem>>, %arg12: memref<1x2x8x128xf32, #tpu.memory_space<vmem>>) attributes {dimension_semantics = [#tpu.dimension_semantics<parallel>], iteration_bounds = array<i64: 2>, scalar_prefetch = 0 : i64, scratch_operands = 0 : i64, tpu.core_type = #tpu.core_type<tc>, window_params = [{pipeline_mode = #tpu.pipeline_mode<synchronous>, transform_indices = @transform_0, window_bounds = array<i64: 16, 64>}, {transform_indices = @transform_1, window_bounds = array<i64: 1, 64, 64>}, {transform_indices = @transform_2, window_bounds = array<i64: 1, 1, 64>}, {transform_indices = @transform_3, window_bounds = array<i64: 1, 64, 32>}, {transform_indices = @transform_4, window_bounds = array<i64: 1, 5, 32>}, {transform_indices = @transform_5, window_bounds = array<i64: 1, 32, 64>}, {transform_indices = @transform_6, window_bounds = array<i64: 1, 1, 64>}, {transform_indices = @transform_7, window_bounds = array<i64: 1, 64, 32>}, {transform_indices = @transform_8, window_bounds = array<i64: 1, 5, 32>}, {transform_indices = @transform_9, window_bounds = array<i64: 1, 32, 128>}, {transform_indices = @transform_10, window_bounds = array<i64: 1, 1, 128>}, {transform_indices = @transform_11, window_bounds = array<i64: 1, 2, 8, 128>}]} {
    %0 = tpu.iota {dimensions = array<i32: 0>} : vector<16x1xi32>
    %c8_i32 = arith.constant 8 : i32
    %c0_i32 = arith.constant 0 : i32
    %1 = arith.cmpi eq, %c8_i32, %c0_i32 : i32
    %c1_i32 = arith.constant 1 : i32
    %2 = arith.select %1, %c1_i32, %c8_i32 : i32
    %3 = vector.broadcast %2 : i32 to vector<16x1xi32>
    %4 = arith.remsi %0, %3 : vector<16x1xi32>
    %c0_i32_0 = arith.constant 0 : i32
    %5 = vector.broadcast %c0_i32_0 : i32 to vector<16x1xi32>
    %6 = arith.cmpi ne, %4, %5 : vector<16x1xi32>
    %c0_i32_1 = arith.constant 0 : i32
    %7 = vector.broadcast %c0_i32_1 : i32 to vector<16x1xi32>
    %8 = arith.cmpi slt, %4, %7 : vector<16x1xi32>
    %c0_i32_2 = arith.constant 0 : i32
    %9 = arith.cmpi slt, %2, %c0_i32_2 : i32
    %10 = vector.broadcast %9 : i1 to vector<16x1xi1>
    %11 = vector.broadcast %10 : vector<16x1xi1> to vector<16x1xi1>
    %12 = arith.xori %8, %11 : vector<16x1xi1>
    %13 = arith.andi %12, %6 : vector<16x1xi1>
    %14 = vector.broadcast %2 : i32 to vector<16x1xi32>
    %15 = arith.addi %4, %14 : vector<16x1xi32>
    %16 = arith.select %13, %15, %4 : vector<16x1xi1>, vector<16x1xi32>
    %c0 = arith.constant 0 : index
    %c0_3 = arith.constant 0 : index
    %17 = vector.load %arg1[%c0, %c0_3] : memref<16x64xf32, #tpu.memory_space<vmem>>, vector<16x64xf32>
    %c0_4 = arith.constant 0 : index
    %c0_5 = arith.constant 0 : index
    %c0_6 = arith.constant 0 : index
    %18 = vector.load %arg2[%c0_4, %c0_5, %c0_6] : memref<1x64x64xf32, #tpu.memory_space<vmem>>, vector<1x64x64xf32>
    %19 = vector.shape_cast %18 : vector<1x64x64xf32> to vector<64x64xf32>
    %20 = arith.truncf %17 : vector<16x64xf32> to vector<16x64xbf16>
    %21 = arith.truncf %19 : vector<64x64xf32> to vector<64x64xbf16>
    %cst = arith.constant dense<0.000000e+00> : vector<16x64xf32>
    %22 = tpu.matmul %20, %21, %cst {dimension_numbers = #tpu.dot_dimension_numbers<[1], [0], [0], [1], [0, 0, 1, 1], [], []>} : vector<16x64xbf16>, vector<64x64xbf16>, vector<16x64xf32> -> vector<16x64xf32>
    %c0_7 = arith.constant 0 : index
    %c0_8 = arith.constant 0 : index
    %c0_9 = arith.constant 0 : index
    %23 = vector.load %arg3[%c0_7, %c0_8, %c0_9] : memref<1x1x64xf32, #tpu.memory_space<vmem>>, vector<1x1x64xf32>
    %24 = vector.shape_cast %23 : vector<1x1x64xf32> to vector<1x64xf32>
    %25 = vector.broadcast %24 : vector<1x64xf32> to vector<16x64xf32>
    %26 = arith.addf %22, %25 : vector<16x64xf32>
    %cst_10 = arith.constant 0.000000e+00 : f32
    %27 = vector.broadcast %cst_10 : f32 to vector<16x64xf32>
    %28 = arith.maximumf %26, %27 : vector<16x64xf32>
    %c0_11 = arith.constant 0 : index
    %c0_12 = arith.constant 0 : index
    %c0_13 = arith.constant 0 : index
    %29 = vector.load %arg4[%c0_11, %c0_12, %c0_13] : memref<1x64x32xf32, #tpu.memory_space<vmem>>, vector<1x64x32xf32>
    %30 = vector.shape_cast %29 : vector<1x64x32xf32> to vector<64x32xf32>
    %31 = arith.truncf %28 : vector<16x64xf32> to vector<16x64xbf16>
    %32 = arith.truncf %30 : vector<64x32xf32> to vector<64x32xbf16>
    %cst_14 = arith.constant dense<0.000000e+00> : vector<16x32xf32>
    %33 = tpu.matmul %31, %32, %cst_14 {dimension_numbers = #tpu.dot_dimension_numbers<[1], [0], [0], [1], [0, 0, 1, 1], [], []>} : vector<16x64xbf16>, vector<64x32xbf16>, vector<16x32xf32> -> vector<16x32xf32>
    %c2_i32 = arith.constant 2 : i32
    %34 = tpu.dynamic_rotate %33 by %c2_i32 dim 0 : vector<16x32xf32>, i32 -> vector<16x32xf32>
    %c2_i32_15 = arith.constant 2 : i32
    %35 = vector.broadcast %c2_i32_15 : i32 to vector<16x1xi32>
    %36 = arith.cmpi sge, %16, %35 : vector<16x1xi32>
    %cst_16 = arith.constant 0.000000e+00 : f32
    %37 = vector.shape_cast %36 : vector<16x1xi1> to vector<16x1xi1>
    %38 = vector.broadcast %37 : vector<16x1xi1> to vector<16x32xi1>
    %39 = vector.broadcast %cst_16 : f32 to vector<16x32xf32>
    %40 = arith.select %38, %34, %39 : vector<16x32xi1>, vector<16x32xf32>
    %c0_17 = arith.constant 0 : index
    %c0_18 = arith.constant 0 : index
    %c0_19 = arith.constant 0 : index
    %41 = vector.load %arg5[%c0_17, %c0_18, %c0_19] : memref<1x5x32xf32, #tpu.memory_space<vmem>>, vector<1x1x32xf32>
    %42 = vector.shape_cast %41 : vector<1x1x32xf32> to vector<32xf32>
    %43 = vector.shape_cast %42 : vector<32xf32> to vector<1x32xf32>
    %44 = vector.broadcast %43 : vector<1x32xf32> to vector<16x32xf32>
    %45 = arith.mulf %40, %44 : vector<16x32xf32>
    %46 = arith.addf %33, %45 : vector<16x32xf32>
    %c1_i32_20 = arith.constant 1 : i32
    %47 = tpu.dynamic_rotate %33 by %c1_i32_20 dim 0 : vector<16x32xf32>, i32 -> vector<16x32xf32>
    %c1_i32_21 = arith.constant 1 : i32
    %48 = vector.broadcast %c1_i32_21 : i32 to vector<16x1xi32>
    %49 = arith.cmpi sge, %16, %48 : vector<16x1xi32>
    %cst_22 = arith.constant 0.000000e+00 : f32
    %50 = vector.shape_cast %49 : vector<16x1xi1> to vector<16x1xi1>
    %51 = vector.broadcast %50 : vector<16x1xi1> to vector<16x32xi1>
    %52 = vector.broadcast %cst_22 : f32 to vector<16x32xf32>
    %53 = arith.select %51, %47, %52 : vector<16x32xi1>, vector<16x32xf32>
    %c0_23 = arith.constant 0 : index
    %c1 = arith.constant 1 : index
    %c0_24 = arith.constant 0 : index
    %54 = vector.load %arg5[%c0_23, %c1, %c0_24] : memref<1x5x32xf32, #tpu.memory_space<vmem>>, vector<1x1x32xf32>
    %55 = vector.shape_cast %54 : vector<1x1x32xf32> to vector<32xf32>
    %56 = vector.shape_cast %55 : vector<32xf32> to vector<1x32xf32>
    %57 = vector.broadcast %56 : vector<1x32xf32> to vector<16x32xf32>
    %58 = arith.mulf %53, %57 : vector<16x32xf32>
    %59 = arith.addf %46, %58 : vector<16x32xf32>
    %c0_25 = arith.constant 0 : index
    %c2 = arith.constant 2 : index
    %c0_26 = arith.constant 0 : index
    %60 = vector.load %arg5[%c0_25, %c2, %c0_26] : memref<1x5x32xf32, #tpu.memory_space<vmem>>, vector<1x1x32xf32>
    %61 = vector.shape_cast %60 : vector<1x1x32xf32> to vector<32xf32>
    %62 = vector.shape_cast %61 : vector<32xf32> to vector<1x32xf32>
    %63 = vector.broadcast %62 : vector<1x32xf32> to vector<16x32xf32>
    %64 = arith.mulf %33, %63 : vector<16x32xf32>
    %65 = arith.addf %59, %64 : vector<16x32xf32>
    %c15_i32 = arith.constant 15 : i32
    %66 = tpu.dynamic_rotate %33 by %c15_i32 dim 0 : vector<16x32xf32>, i32 -> vector<16x32xf32>
    %c7_i32 = arith.constant 7 : i32
    %67 = vector.broadcast %c7_i32 : i32 to vector<16x1xi32>
    %68 = arith.cmpi slt, %16, %67 : vector<16x1xi32>
    %cst_27 = arith.constant 0.000000e+00 : f32
    %69 = vector.shape_cast %68 : vector<16x1xi1> to vector<16x1xi1>
    %70 = vector.broadcast %69 : vector<16x1xi1> to vector<16x32xi1>
    %71 = vector.broadcast %cst_27 : f32 to vector<16x32xf32>
    %72 = arith.select %70, %66, %71 : vector<16x32xi1>, vector<16x32xf32>
    %c0_28 = arith.constant 0 : index
    %c3 = arith.constant 3 : index
    %c0_29 = arith.constant 0 : index
    %73 = vector.load %arg5[%c0_28, %c3, %c0_29] : memref<1x5x32xf32, #tpu.memory_space<vmem>>, vector<1x1x32xf32>
    %74 = vector.shape_cast %73 : vector<1x1x32xf32> to vector<32xf32>
    %75 = vector.shape_cast %74 : vector<32xf32> to vector<1x32xf32>
    %76 = vector.broadcast %75 : vector<1x32xf32> to vector<16x32xf32>
    %77 = arith.mulf %72, %76 : vector<16x32xf32>
    %78 = arith.addf %65, %77 : vector<16x32xf32>
    %c14_i32 = arith.constant 14 : i32
    %79 = tpu.dynamic_rotate %33 by %c14_i32 dim 0 : vector<16x32xf32>, i32 -> vector<16x32xf32>
    %c6_i32 = arith.constant 6 : i32
    %80 = vector.broadcast %c6_i32 : i32 to vector<16x1xi32>
    %81 = arith.cmpi slt, %16, %80 : vector<16x1xi32>
    %cst_30 = arith.constant 0.000000e+00 : f32
    %82 = vector.shape_cast %81 : vector<16x1xi1> to vector<16x1xi1>
    %83 = vector.broadcast %82 : vector<16x1xi1> to vector<16x32xi1>
    %84 = vector.broadcast %cst_30 : f32 to vector<16x32xf32>
    %85 = arith.select %83, %79, %84 : vector<16x32xi1>, vector<16x32xf32>
    %c0_31 = arith.constant 0 : index
    %c4 = arith.constant 4 : index
    %c0_32 = arith.constant 0 : index
    %86 = vector.load %arg5[%c0_31, %c4, %c0_32] : memref<1x5x32xf32, #tpu.memory_space<vmem>>, vector<1x1x32xf32>
    %87 = vector.shape_cast %86 : vector<1x1x32xf32> to vector<32xf32>
    %88 = vector.shape_cast %87 : vector<32xf32> to vector<1x32xf32>
    %89 = vector.broadcast %88 : vector<1x32xf32> to vector<16x32xf32>
    %90 = arith.mulf %85, %89 : vector<16x32xf32>
    %91 = arith.addf %78, %90 : vector<16x32xf32>
    %c0_33 = arith.constant 0 : index
    %c0_34 = arith.constant 0 : index
    %c0_35 = arith.constant 0 : index
    %92 = vector.load %arg6[%c0_33, %c0_34, %c0_35] : memref<1x32x64xf32, #tpu.memory_space<vmem>>, vector<1x32x64xf32>
    %93 = vector.shape_cast %92 : vector<1x32x64xf32> to vector<32x64xf32>
    %94 = arith.truncf %91 : vector<16x32xf32> to vector<16x32xbf16>
    %95 = arith.truncf %93 : vector<32x64xf32> to vector<32x64xbf16>
    %cst_36 = arith.constant dense<0.000000e+00> : vector<16x64xf32>
    %96 = tpu.matmul %94, %95, %cst_36 {dimension_numbers = #tpu.dot_dimension_numbers<[1], [0], [0], [1], [0, 0, 1, 1], [], []>} : vector<16x32xbf16>, vector<32x64xbf16>, vector<16x64xf32> -> vector<16x64xf32>
    %c0_37 = arith.constant 0 : index
    %c0_38 = arith.constant 0 : index
    %c0_39 = arith.constant 0 : index
    %97 = vector.load %arg7[%c0_37, %c0_38, %c0_39] : memref<1x1x64xf32, #tpu.memory_space<vmem>>, vector<1x1x64xf32>
    %98 = vector.shape_cast %97 : vector<1x1x64xf32> to vector<1x64xf32>
    %99 = vector.broadcast %98 : vector<1x64xf32> to vector<16x64xf32>
    %100 = arith.addf %96, %99 : vector<16x64xf32>
    %cst_40 = arith.constant 0.000000e+00 : f32
    %101 = vector.broadcast %cst_40 : f32 to vector<16x64xf32>
    %102 = arith.maximumf %100, %101 : vector<16x64xf32>
    %c0_41 = arith.constant 0 : index
    %c0_42 = arith.constant 0 : index
    %c0_43 = arith.constant 0 : index
    %103 = vector.load %arg8[%c0_41, %c0_42, %c0_43] : memref<1x64x32xf32, #tpu.memory_space<vmem>>, vector<1x64x32xf32>
    %104 = vector.shape_cast %103 : vector<1x64x32xf32> to vector<64x32xf32>
    %105 = arith.truncf %102 : vector<16x64xf32> to vector<16x64xbf16>
    %106 = arith.truncf %104 : vector<64x32xf32> to vector<64x32xbf16>
    %cst_44 = arith.constant dense<0.000000e+00> : vector<16x32xf32>
    %107 = tpu.matmul %105, %106, %cst_44 {dimension_numbers = #tpu.dot_dimension_numbers<[1], [0], [0], [1], [0, 0, 1, 1], [], []>} : vector<16x64xbf16>, vector<64x32xbf16>, vector<16x32xf32> -> vector<16x32xf32>
    %c2_i32_45 = arith.constant 2 : i32
    %108 = tpu.dynamic_rotate %107 by %c2_i32_45 dim 0 : vector<16x32xf32>, i32 -> vector<16x32xf32>
    %c2_i32_46 = arith.constant 2 : i32
    %109 = vector.broadcast %c2_i32_46 : i32 to vector<16x1xi32>
    %110 = arith.cmpi sge, %16, %109 : vector<16x1xi32>
    %cst_47 = arith.constant 0.000000e+00 : f32
    %111 = vector.shape_cast %110 : vector<16x1xi1> to vector<16x1xi1>
    %112 = vector.broadcast %111 : vector<16x1xi1> to vector<16x32xi1>
    %113 = vector.broadcast %cst_47 : f32 to vector<16x32xf32>
    %114 = arith.select %112, %108, %113 : vector<16x32xi1>, vector<16x32xf32>
    %c0_48 = arith.constant 0 : index
    %c0_49 = arith.constant 0 : index
    %c0_50 = arith.constant 0 : index
    %115 = vector.load %arg9[%c0_48, %c0_49, %c0_50] : memref<1x5x32xf32, #tpu.memory_space<vmem>>, vector<1x1x32xf32>
    %116 = vector.shape_cast %115 : vector<1x1x32xf32> to vector<32xf32>
    %117 = vector.shape_cast %116 : vector<32xf32> to vector<1x32xf32>
    %118 = vector.broadcast %117 : vector<1x32xf32> to vector<16x32xf32>
    %119 = arith.mulf %114, %118 : vector<16x32xf32>
    %120 = arith.addf %107, %119 : vector<16x32xf32>
    %c1_i32_51 = arith.constant 1 : i32
    %121 = tpu.dynamic_rotate %107 by %c1_i32_51 dim 0 : vector<16x32xf32>, i32 -> vector<16x32xf32>
    %c1_i32_52 = arith.constant 1 : i32
    %122 = vector.broadcast %c1_i32_52 : i32 to vector<16x1xi32>
    %123 = arith.cmpi sge, %16, %122 : vector<16x1xi32>
    %cst_53 = arith.constant 0.000000e+00 : f32
    %124 = vector.shape_cast %123 : vector<16x1xi1> to vector<16x1xi1>
    %125 = vector.broadcast %124 : vector<16x1xi1> to vector<16x32xi1>
    %126 = vector.broadcast %cst_53 : f32 to vector<16x32xf32>
    %127 = arith.select %125, %121, %126 : vector<16x32xi1>, vector<16x32xf32>
    %c0_54 = arith.constant 0 : index
    %c1_55 = arith.constant 1 : index
    %c0_56 = arith.constant 0 : index
    %128 = vector.load %arg9[%c0_54, %c1_55, %c0_56] : memref<1x5x32xf32, #tpu.memory_space<vmem>>, vector<1x1x32xf32>
    %129 = vector.shape_cast %128 : vector<1x1x32xf32> to vector<32xf32>
    %130 = vector.shape_cast %129 : vector<32xf32> to vector<1x32xf32>
    %131 = vector.broadcast %130 : vector<1x32xf32> to vector<16x32xf32>
    %132 = arith.mulf %127, %131 : vector<16x32xf32>
    %133 = arith.addf %120, %132 : vector<16x32xf32>
    %c0_57 = arith.constant 0 : index
    %c2_58 = arith.constant 2 : index
    %c0_59 = arith.constant 0 : index
    %134 = vector.load %arg9[%c0_57, %c2_58, %c0_59] : memref<1x5x32xf32, #tpu.memory_space<vmem>>, vector<1x1x32xf32>
    %135 = vector.shape_cast %134 : vector<1x1x32xf32> to vector<32xf32>
    %136 = vector.shape_cast %135 : vector<32xf32> to vector<1x32xf32>
    %137 = vector.broadcast %136 : vector<1x32xf32> to vector<16x32xf32>
    %138 = arith.mulf %107, %137 : vector<16x32xf32>
    %139 = arith.addf %133, %138 : vector<16x32xf32>
    %c15_i32_60 = arith.constant 15 : i32
    %140 = tpu.dynamic_rotate %107 by %c15_i32_60 dim 0 : vector<16x32xf32>, i32 -> vector<16x32xf32>
    %c7_i32_61 = arith.constant 7 : i32
    %141 = vector.broadcast %c7_i32_61 : i32 to vector<16x1xi32>
    %142 = arith.cmpi slt, %16, %141 : vector<16x1xi32>
    %cst_62 = arith.constant 0.000000e+00 : f32
    %143 = vector.shape_cast %142 : vector<16x1xi1> to vector<16x1xi1>
    %144 = vector.broadcast %143 : vector<16x1xi1> to vector<16x32xi1>
    %145 = vector.broadcast %cst_62 : f32 to vector<16x32xf32>
    %146 = arith.select %144, %140, %145 : vector<16x32xi1>, vector<16x32xf32>
    %c0_63 = arith.constant 0 : index
    %c3_64 = arith.constant 3 : index
    %c0_65 = arith.constant 0 : index
    %147 = vector.load %arg9[%c0_63, %c3_64, %c0_65] : memref<1x5x32xf32, #tpu.memory_space<vmem>>, vector<1x1x32xf32>
    %148 = vector.shape_cast %147 : vector<1x1x32xf32> to vector<32xf32>
    %149 = vector.shape_cast %148 : vector<32xf32> to vector<1x32xf32>
    %150 = vector.broadcast %149 : vector<1x32xf32> to vector<16x32xf32>
    %151 = arith.mulf %146, %150 : vector<16x32xf32>
    %152 = arith.addf %139, %151 : vector<16x32xf32>
    %c14_i32_66 = arith.constant 14 : i32
    %153 = tpu.dynamic_rotate %107 by %c14_i32_66 dim 0 : vector<16x32xf32>, i32 -> vector<16x32xf32>
    %c6_i32_67 = arith.constant 6 : i32
    %154 = vector.broadcast %c6_i32_67 : i32 to vector<16x1xi32>
    %155 = arith.cmpi slt, %16, %154 : vector<16x1xi32>
    %cst_68 = arith.constant 0.000000e+00 : f32
    %156 = vector.shape_cast %155 : vector<16x1xi1> to vector<16x1xi1>
    %157 = vector.broadcast %156 : vector<16x1xi1> to vector<16x32xi1>
    %158 = vector.broadcast %cst_68 : f32 to vector<16x32xf32>
    %159 = arith.select %157, %153, %158 : vector<16x32xi1>, vector<16x32xf32>
    %c0_69 = arith.constant 0 : index
    %c4_70 = arith.constant 4 : index
    %c0_71 = arith.constant 0 : index
    %160 = vector.load %arg9[%c0_69, %c4_70, %c0_71] : memref<1x5x32xf32, #tpu.memory_space<vmem>>, vector<1x1x32xf32>
    %161 = vector.shape_cast %160 : vector<1x1x32xf32> to vector<32xf32>
    %162 = vector.shape_cast %161 : vector<32xf32> to vector<1x32xf32>
    %163 = vector.broadcast %162 : vector<1x32xf32> to vector<16x32xf32>
    %164 = arith.mulf %159, %163 : vector<16x32xf32>
    %165 = arith.addf %152, %164 : vector<16x32xf32>
    %166 = arith.addf %165, %91 : vector<16x32xf32>
    %c0_72 = arith.constant 0 : index
    %c0_73 = arith.constant 0 : index
    %c0_74 = arith.constant 0 : index
    %167 = vector.load %arg10[%c0_72, %c0_73, %c0_74] : memref<1x32x128xf32, #tpu.memory_space<vmem>>, vector<1x32x128xf32>
    %168 = vector.shape_cast %167 : vector<1x32x128xf32> to vector<32x128xf32>
    %169 = arith.truncf %166 : vector<16x32xf32> to vector<16x32xbf16>
    %170 = arith.truncf %168 : vector<32x128xf32> to vector<32x128xbf16>
    %cst_75 = arith.constant dense<0.000000e+00> : vector<16x128xf32>
    %171 = tpu.matmul %169, %170, %cst_75 {dimension_numbers = #tpu.dot_dimension_numbers<[1], [0], [0], [1], [0, 0, 1, 1], [], []>} : vector<16x32xbf16>, vector<32x128xbf16>, vector<16x128xf32> -> vector<16x128xf32>
    %c0_76 = arith.constant 0 : index
    %c0_77 = arith.constant 0 : index
    %c0_78 = arith.constant 0 : index
    %172 = vector.load %arg11[%c0_76, %c0_77, %c0_78] : memref<1x1x128xf32, #tpu.memory_space<vmem>>, vector<1x1x128xf32>
    %173 = vector.shape_cast %172 : vector<1x1x128xf32> to vector<1x128xf32>
    %174 = vector.broadcast %173 : vector<1x128xf32> to vector<16x128xf32>
    %175 = arith.addf %171, %174 : vector<16x128xf32>
    %176 = vector.shape_cast %175 : vector<16x128xf32> to vector<2x8x128xf32>
    %c0_79 = arith.constant 0 : index
    %c0_80 = arith.constant 0 : index
    %c0_81 = arith.constant 0 : index
    %c0_82 = arith.constant 0 : index
    %177 = vector.load %arg12[%c0_79, %c0_80, %c0_81, %c0_82] : memref<1x2x8x128xf32, #tpu.memory_space<vmem>>, vector<1x2x8x128xf32>
    %178 = vector.shape_cast %177 : vector<1x2x8x128xf32> to vector<2x8x128xf32>
    %179 = vector.shape_cast %176 : vector<2x8x128xf32> to vector<1x2x8x128xf32>
    tpu.vector_store %arg12[%c0_79, %c0_80, %c0_81, %c0_82], %179 {strides = array<i32>} : memref<1x2x8x128xf32, #tpu.memory_space<vmem>>, vector<1x2x8x128xf32>,
    return
  }
  func.func @transform_0(%arg0: i32) -> (i32, i32) {
    %c0_i32 = arith.constant 0 : i32
    %c0_i32_0 = arith.constant 0 : i32
    %c0_i32_1 = arith.constant 0 : i32
    return %c0_i32, %c0_i32_0 : i32, i32
  }
  func.func @transform_1(%arg0: i32) -> (i32, i32, i32) {
    %c0_i32 = arith.constant 0 : i32
    %c0_i32_0 = arith.constant 0 : i32
    %c0_i32_1 = arith.constant 0 : i32
    return %arg0, %c0_i32, %c0_i32_0 : i32, i32, i32
  }
  func.func @transform_2(%arg0: i32) -> (i32, i32, i32) {
    %c0_i32 = arith.constant 0 : i32
    %c0_i32_0 = arith.constant 0 : i32
    %c0_i32_1 = arith.constant 0 : i32
    return %arg0, %c0_i32, %c0_i32_0 : i32, i32, i32
  }
  func.func @transform_3(%arg0: i32) -> (i32, i32, i32) {
    %c0_i32 = arith.constant 0 : i32
    %c0_i32_0 = arith.constant 0 : i32
    %c0_i32_1 = arith.constant 0 : i32
    return %arg0, %c0_i32, %c0_i32_0 : i32, i32, i32
  }
  func.func @transform_4(%arg0: i32) -> (i32, i32, i32) {
    %c0_i32 = arith.constant 0 : i32
    %c0_i32_0 = arith.constant 0 : i32
    %c0_i32_1 = arith.constant 0 : i32
    return %arg0, %c0_i32, %c0_i32_0 : i32, i32, i32
  }
  func.func @transform_5(%arg0: i32) -> (i32, i32, i32) {
    %c0_i32 = arith.constant 0 : i32
    %c0_i32_0 = arith.constant 0 : i32
    %c0_i32_1 = arith.constant 0 : i32
    return %arg0, %c0_i32, %c0_i32_0 : i32, i32, i32
  }
  func.func @transform_6(%arg0: i32) -> (i32, i32, i32) {
    %c0_i32 = arith.constant 0 : i32
    %c0_i32_0 = arith.constant 0 : i32
    %c0_i32_1 = arith.constant 0 : i32
    return %arg0, %c0_i32, %c0_i32_0 : i32, i32, i32
  }
  func.func @transform_7(%arg0: i32) -> (i32, i32, i32) {
    %c0_i32 = arith.constant 0 : i32
    %c0_i32_0 = arith.constant 0 : i32
    %c0_i32_1 = arith.constant 0 : i32
    return %arg0, %c0_i32, %c0_i32_0 : i32, i32, i32
  }
  func.func @transform_8(%arg0: i32) -> (i32, i32, i32) {
    %c0_i32 = arith.constant 0 : i32
    %c0_i32_0 = arith.constant 0 : i32
    %c0_i32_1 = arith.constant 0 : i32
    return %arg0, %c0_i32, %c0_i32_0 : i32, i32, i32
  }
  func.func @transform_9(%arg0: i32) -> (i32, i32, i32) {
    %c0_i32 = arith.constant 0 : i32
    %c0_i32_0 = arith.constant 0 : i32
    %c0_i32_1 = arith.constant 0 : i32
    return %arg0, %c0_i32, %c0_i32_0 : i32, i32, i32
  }
  func.func @transform_10(%arg0: i32) -> (i32, i32, i32) {
    %c0_i32 = arith.constant 0 : i32
    %c0_i32_0 = arith.constant 0 : i32
    %c0_i32_1 = arith.constant 0 : i32
    return %arg0, %c0_i32, %c0_i32_0 : i32, i32, i32
  }
  func.func @transform_11(%arg0: i32) -> (i32, i32, i32, i32) {
    %c0_i32 = arith.constant 0 : i32
    %c0_i32_0 = arith.constant 0 : i32
    %c0_i32_1 = arith.constant 0 : i32
    %c0_i32_2 = arith.constant 0 : i32
    return %arg0, %c0_i32, %c0_i32_0, %c0_i32_1 : i32, i32, i32, i32
  }
}

</mosaic_0001>

<llo_original>
// kernel: tpu_custom_call.1
$region0: #{tpu_custom_call.1}
  #allocation0 [shape = 'u32[]', space=smem, size = 0x4, offset = 0x4, fixed_abs, tag = 'smem constant byte address 0x4 - core index']
  #allocation1 [shape = 'u32[144,128]{1,0:T(1,128)}', space=vmem, size = 0x12000, scoped, tag = 'internal scratch']
  %s0 = inlined_call_operand.vmem [shape: f32[16,64], index: 0, kind: input, shape index: {}]
  %s1 = inlined_call_operand.vmem [shape: f32[2,64,64], index: 1, kind: input, shape index: {}]
  %s2 = inlined_call_operand.vmem [shape: f32[2,1,64], index: 2, kind: input, shape index: {}]
  %s3 = inlined_call_operand.vmem [shape: f32[2,64,32], index: 3, kind: input, shape index: {}]
  %s4 = inlined_call_operand.vmem [shape: f32[2,5,32], index: 4, kind: input, shape index: {}]
  %s5 = inlined_call_operand.vmem [shape: f32[2,32,64], index: 5, kind: input, shape index: {}]
  %s6 = inlined_call_operand.vmem [shape: f32[2,1,64], index: 6, kind: input, shape index: {}]
  %s7 = inlined_call_operand.vmem [shape: f32[2,64,32], index: 7, kind: input, shape index: {}]
  %s8 = inlined_call_operand.vmem [shape: f32[2,5,32], index: 8, kind: input, shape index: {}]
  %s9 = inlined_call_operand.vmem [shape: f32[2,32,128], index: 9, kind: input, shape index: {}]
  %s10 = inlined_call_operand.vmem [shape: f32[2,1,128], index: 10, kind: input, shape index: {}]
  %s11 = inlined_call_operand.hbm [shape: f32[2,2,8,128], index: 11, kind: output, shape index: {}]
  %s12 = sld [smem:[#allocation0]]
  $region77: #{tpu_custom_call.1} parent=0
    _
  %s14 = ssub.s32 1, %s12
  %s15 = scalar_select 0, %s14, %s12
  $region1: #{tpu_custom_call.1} parent=0
    #allocation2 [shape = 'u8[16384]{0}', space=vmem, size = 0x4000, scoped, tag = 'output window, operand 0']
    #allocation3 [shape = 's32[2]{0}', space=sflag, size = 0x8, scoped, tag = 'scoped memory for tpu_custom_call.1']
    %16 = vsyncpa [#allocation3], 0
    %s17 = scalar_lea.sflag [#allocation3], 1
    %18 = vsyncpa %s17, 0
    loop: start=0, step=1, limit=4
    $region2: #{tpu_custom_call.1} parent=1 // loop_pre_header
      _
    $region3: #{tpu_custom_call.1} parent=1 // loop_header
      %s20 = sphi 0, %s24
      %p21 = scmp.ge.s32.totalorder %s20, 4
      %s28 = sphi 0, %s28
      %s30 = sphi 0, %s28
      %s31 = sphi 0, %s30
      %s45 = sphi 0, %s31
      %s51 = sphi 0, %s53
      %s54 = sphi 0, %s51
      %s55 = sphi 0, %s54
      %s71 = sphi 0, %s55
      %s77 = sphi 0, %s79
      %s80 = sphi 0, %s77
      %s81 = sphi 0, %s80
      %s97 = sphi 0, %s81
      %s103 = sphi 0, %s105
      %s106 = sphi 0, %s103
      %s107 = sphi 0, %s106
      %s123 = sphi 0, %s107
      %s129 = sphi 0, %s131
      %s132 = sphi 0, %s129
      %s133 = sphi 0, %s132
      %s149 = sphi 0, %s133
      %s155 = sphi 0, %s157
      %s158 = sphi 0, %s155
      %s159 = sphi 0, %s158
      %s175 = sphi 0, %s159
      %s181 = sphi 0, %s183
      %s184 = sphi 0, %s181
      %s185 = sphi 0, %s184
      %s201 = sphi 0, %s185
      %s207 = sphi 0, %s209
      %s210 = sphi 0, %s207
      %s211 = sphi 0, %s210
      %s227 = sphi 0, %s211
      %s233 = sphi 0, %s235
      %s236 = sphi 0, %s233
      %s237 = sphi 0, %s236
      %s253 = sphi 0, %s237
      %s259 = sphi 0, %s261
      %s262 = sphi 0, %s259
      %s263 = sphi 0, %s262
      %s279 = sphi 0, %s263
      %s285 = sphi 0, %s287
      %s288 = sphi 0, %s285
      %s289 = sphi 0, %s288
      %s305 = sphi 0, %s289
      %s311 = sphi 0, %s313
      %s314 = sphi 0, %s311
      %s315 = sphi 0, %s314
      %s331 = sphi 0, %s315
    $region4: #{tpu_custom_call.1} parent=1 // loop_header_branch
      %23 = sbr.rel (%p21) target = $region8
    $region5: #{tpu_custom_call.1} parent=1 // loop_body
      %s25 = ssub.s32 %s20, 1
      %s26 = ssub.s32 %s20, 2
      %s27 = sadd.s32 %s20, 1
      %s29 = sadd.s32 %s28, 1
      %p32 = scmp.eq.s32.totalorder %s20, 1
      %p33 = scmp.ne.s32.totalorder %s28, %s30
      %p34 = scmp.eq.s32.totalorder %s20, 0
      %p35 = por %p33, %p34
      %p36 = scmp.ne.s32.totalorder %s28, %s30
      %p37 = scmp.eq.s32.totalorder %s25, 1
      %p38 = por %p36, %p37
      %p39 = scmp.ne.s32.totalorder %s30, %s31
      %p40 = scmp.eq.s32.totalorder %s25, 0
      %p41 = por %p39, %p40
      %p42 = scmp.ne.s32.totalorder %s30, %s31
      %p43 = scmp.eq.s32.totalorder %s26, 1
      %p44 = por %p42, %p43
      %p46 = scmp.ne.s32.totalorder %s31, %s45
      %p47 = scmp.eq.s32.totalorder %s26, 0
      %p48 = por %p46, %p47
      %s49 = ssub.s32 %s20, %s27
      %p50 = scmp.eq.s32.totalorder %s49, 0
      %s52 = sadd.s32 %s51, 1
      %s53 = scalar_select %p50, %s51, %s52
      %p56 = pneg %p50
      %p57 = scmp.eq.s32.totalorder %s20, 1
      %p58 = por %p56, %p57
      %p59 = scmp.ne.s32.totalorder %s51, %s54
      %p60 = scmp.eq.s32.totalorder %s20, 0
      %p61 = por %p59, %p60
      %p62 = scmp.ne.s32.totalorder %s51, %s54
      %p63 = scmp.eq.s32.totalorder %s25, 1
      %p64 = por %p62, %p63
      %p65 = scmp.ne.s32.totalorder %s54, %s55
      %p66 = scmp.eq.s32.totalorder %s25, 0
      %p67 = por %p65, %p66
      %p68 = scmp.ne.s32.totalorder %s54, %s55
      %p69 = scmp.eq.s32.totalorder %s26, 1
      %p70 = por %p68, %p69
      %p72 = scmp.ne.s32.totalorder %s55, %s71
      %p73 = scmp.eq.s32.totalorder %s26, 0
      %p74 = por %p72, %p73
      %s75 = ssub.s32 %s20, %s27
      %p76 = scmp.eq.s32.totalorder %s75, 0
      %s78 = sadd.s32 %s77, 1
      %s79 = scalar_select %p76, %s77, %s78
      %p82 = pneg %p76
      %p83 = scmp.eq.s32.totalorder %s20, 1
      %p84 = por %p82, %p83
      %p85 = scmp.ne.s32.totalorder %s77, %s80
      %p86 = scmp.eq.s32.totalorder %s20, 0
      %p87 = por %p85, %p86
      %p88 = scmp.ne.s32.totalorder %s77, %s80
      %p89 = scmp.eq.s32.totalorder %s25, 1
      %p90 = por %p88, %p89
      %p91 = scmp.ne.s32.totalorder %s80, %s81
      %p92 = scmp.eq.s32.totalorder %s25, 0
      %p93 = por %p91, %p92
      %p94 = scmp.ne.s32.totalorder %s80, %s81
      %p95 = scmp.eq.s32.totalorder %s26, 1
      %p96 = por %p94, %p95
      %p98 = scmp.ne.s32.totalorder %s81, %s97
      %p99 = scmp.eq.s32.totalorder %s26, 0
      %p100 = por %p98, %p99
      %s101 = ssub.s32 %s20, %s27
      %p102 = scmp.eq.s32.totalorder %s101, 0
      %s104 = sadd.s32 %s103, 1
      %s105 = scalar_select %p102, %s103, %s104
      %p108 = pneg %p102
      %p109 = scmp.eq.s32.totalorder %s20, 1
      %p110 = por %p108, %p109
      %p111 = scmp.ne.s32.totalorder %s103, %s106
      %p112 = scmp.eq.s32.totalorder %s20, 0
      %p113 = por %p111, %p112
      %p114 = scmp.ne.s32.totalorder %s103, %s106
      %p115 = scmp.eq.s32.totalorder %s25, 1
      %p116 = por %p114, %p115
      %p117 = scmp.ne.s32.totalorder %s106, %s107
      %p118 = scmp.eq.s32.totalorder %s25, 0
      %p119 = por %p117, %p118
      %p120 = scmp.ne.s32.totalorder %s106, %s107
      %p121 = scmp.eq.s32.totalorder %s26, 1
      %p122 = por %p120, %p121
      %p124 = scmp.ne.s32.totalorder %s107, %s123
      %p125 = scmp.eq.s32.totalorder %s26, 0
      %p126 = por %p124, %p125
      %s127 = ssub.s32 %s20, %s27
      %p128 = scmp.eq.s32.totalorder %s127, 0
      %s130 = sadd.s32 %s129, 1
      %s131 = scalar_select %p128, %s129, %s130
      %p134 = pneg %p128
      %p135 = scmp.eq.s32.totalorder %s20, 1
      %p136 = por %p134, %p135
      %p137 = scmp.ne.s32.totalorder %s129, %s132
      %p138 = scmp.eq.s32.totalorder %s20, 0
      %p139 = por %p137, %p138
      %p140 = scmp.ne.s32.totalorder %s129, %s132
      %p141 = scmp.eq.s32.totalorder %s25, 1
      %p142 = por %p140, %p141
      %p143 = scmp.ne.s32.totalorder %s132, %s133
      %p144 = scmp.eq.s32.totalorder %s25, 0
      %p145 = por %p143, %p144
      %p146 = scmp.ne.s32.totalorder %s132, %s133
      %p147 = scmp.eq.s32.totalorder %s26, 1
      %p148 = por %p146, %p147
      %p150 = scmp.ne.s32.totalorder %s133, %s149
      %p151 = scmp.eq.s32.totalorder %s26, 0
      %p152 = por %p150, %p151
      %s153 = ssub.s32 %s20, %s27
      %p154 = scmp.eq.s32.totalorder %s153, 0
      %s156 = sadd.s32 %s155, 1
      %s157 = scalar_select %p154, %s155, %s156
      %p160 = pneg %p154
      %p161 = scmp.eq.s32.totalorder %s20, 1
      %p162 = por %p160, %p161
      %p163 = scmp.ne.s32.totalorder %s155, %s158
      %p164 = scmp.eq.s32.totalorder %s20, 0
      %p165 = por %p163, %p164
      %p166 = scmp.ne.s32.totalorder %s155, %s158
      %p167 = scmp.eq.s32.totalorder %s25, 1
      %p168 = por %p166, %p167
      %p169 = scmp.ne.s32.totalorder %s158, %s159
      %p170 = scmp.eq.s32.totalorder %s25, 0
      %p171 = por %p169, %p170
      %p172 = scmp.ne.s32.totalorder %s158, %s159
      %p173 = scmp.eq.s32.totalorder %s26, 1
      %p174 = por %p172, %p173
      %p176 = scmp.ne.s32.totalorder %s159, %s175
      %p177 = scmp.eq.s32.totalorder %s26, 0
      %p178 = por %p176, %p177
      %s179 = ssub.s32 %s20, %s27
      %p180 = scmp.eq.s32.totalorder %s179, 0
      %s182 = sadd.s32 %s181, 1
      %s183 = scalar_select %p180, %s181, %s182
      %p186 = pneg %p180
      %p187 = scmp.eq.s32.totalorder %s20, 1
      %p188 = por %p186, %p187
      %p189 = scmp.ne.s32.totalorder %s181, %s184
      %p190 = scmp.eq.s32.totalorder %s20, 0
      %p191 = por %p189, %p190
      %p192 = scmp.ne.s32.totalorder %s181, %s184
      %p193 = scmp.eq.s32.totalorder %s25, 1
      %p194 = por %p192, %p193
      %p195 = scmp.ne.s32.totalorder %s184, %s185
      %p196 = scmp.eq.s32.totalorder %s25, 0
      %p197 = por %p195, %p196
      %p198 = scmp.ne.s32.totalorder %s184, %s185
      %p199 = scmp.eq.s32.totalorder %s26, 1
      %p200 = por %p198, %p199
      %p202 = scmp.ne.s32.totalorder %s185, %s201
      %p203 = scmp.eq.s32.totalorder %s26, 0
      %p204 = por %p202, %p203
      %s205 = ssub.s32 %s20, %s27
      %p206 = scmp.eq.s32.totalorder %s205, 0
      %s208 = sadd.s32 %s207, 1
      %s209 = scalar_select %p206, %s207, %s208
      %p212 = pneg %p206
      %p213 = scmp.eq.s32.totalorder %s20, 1
      %p214 = por %p212, %p213
      %p215 = scmp.ne.s32.totalorder %s207, %s210
      %p216 = scmp.eq.s32.totalorder %s20, 0
      %p217 = por %p215, %p216
      %p218 = scmp.ne.s32.totalorder %s207, %s210
      %p219 = scmp.eq.s32.totalorder %s25, 1
      %p220 = por %p218, %p219
      %p221 = scmp.ne.s32.totalorder %s210, %s211
      %p222 = scmp.eq.s32.totalorder %s25, 0
      %p223 = por %p221, %p222
      %p224 = scmp.ne.s32.totalorder %s210, %s211
      %p225 = scmp.eq.s32.totalorder %s26, 1
      %p226 = por %p224, %p225
      %p228 = scmp.ne.s32.totalorder %s211, %s227
      %p229 = scmp.eq.s32.totalorder %s26, 0
      %p230 = por %p228, %p229
      %s231 = ssub.s32 %s20, %s27
      %p232 = scmp.eq.s32.totalorder %s231, 0
      %s234 = sadd.s32 %s233, 1
      %s235 = scalar_select %p232, %s233, %s234
      %p238 = pneg %p232
      %p239 = scmp.eq.s32.totalorder %s20, 1
      %p240 = por %p238, %p239
      %p241 = scmp.ne.s32.totalorder %s233, %s236
      %p242 = scmp.eq.s32.totalorder %s20, 0
      %p243 = por %p241, %p242
      %p244 = scmp.ne.s32.totalorder %s233, %s236
      %p245 = scmp.eq.s32.totalorder %s25, 1
      %p246 = por %p244, %p245
      %p247 = scmp.ne.s32.totalorder %s236, %s237
      %p248 = scmp.eq.s32.totalorder %s25, 0
      %p249 = por %p247, %p248
      %p250 = scmp.ne.s32.totalorder %s236, %s237
      %p251 = scmp.eq.s32.totalorder %s26, 1
      %p252 = por %p250, %p251
      %p254 = scmp.ne.s32.totalorder %s237, %s253
      %p255 = scmp.eq.s32.totalorder %s26, 0
      %p256 = por %p254, %p255
      %s257 = ssub.s32 %s20, %s27
      %p258 = scmp.eq.s32.totalorder %s257, 0
      %s260 = sadd.s32 %s259, 1
      %s261 = scalar_select %p258, %s259, %s260
      %p264 = pneg %p258
      %p265 = scmp.eq.s32.totalorder %s20, 1
      %p266 = por %p264, %p265
      %p267 = scmp.ne.s32.totalorder %s259, %s262
      %p268 = scmp.eq.s32.totalorder %s20, 0
      %p269 = por %p267, %p268
      %p270 = scmp.ne.s32.totalorder %s259, %s262
      %p271 = scmp.eq.s32.totalorder %s25, 1
      %p272 = por %p270, %p271
      %p273 = scmp.ne.s32.totalorder %s262, %s263
      %p274 = scmp.eq.s32.totalorder %s25, 0
      %p275 = por %p273, %p274
      %p276 = scmp.ne.s32.totalorder %s262, %s263
      %p277 = scmp.eq.s32.totalorder %s26, 1
      %p278 = por %p276, %p277
      %p280 = scmp.ne.s32.totalorder %s263, %s279
      %p281 = scmp.eq.s32.totalorder %s26, 0
      %p282 = por %p280, %p281
      %s283 = ssub.s32 %s20, %s27
      %p284 = scmp.eq.s32.totalorder %s283, 0
      %s286 = sadd.s32 %s285, 1
      %s287 = scalar_select %p284, %s285, %s286
      %p290 = pneg %p284
      %p291 = scmp.eq.s32.totalorder %s20, 1
      %p292 = por %p290, %p291
      %p293 = scmp.ne.s32.totalorder %s285, %s288
      %p294 = scmp.eq.s32.totalorder %s20, 0
      %p295 = por %p293, %p294
      %p296 = scmp.ne.s32.totalorder %s285, %s288
      %p297 = scmp.eq.s32.totalorder %s25, 1
      %p298 = por %p296, %p297
      %p299 = scmp.ne.s32.totalorder %s288, %s289
      %p300 = scmp.eq.s32.totalorder %s25, 0
      %p301 = por %p299, %p300
      %p302 = scmp.ne.s32.totalorder %s288, %s289
      %p303 = scmp.eq.s32.totalorder %s26, 1
      %p304 = por %p302, %p303
      %p306 = scmp.ne.s32.totalorder %s289, %s305
      %p307 = scmp.eq.s32.totalorder %s26, 0
      %p308 = por %p306, %p307
      %s309 = ssub.s32 %s20, %s27
      %p310 = scmp.eq.s32.totalorder %s309, 0
      %s312 = sadd.s32 %s311, 1
      %s313 = scalar_select %p310, %s311, %s312
      %p316 = pneg %p310
      %p317 = scmp.eq.s32.totalorder %s20, 1
      %p318 = por %p316, %p317
      %p319 = scmp.ne.s32.totalorder %s311, %s314
      %p320 = scmp.eq.s32.totalorder %s20, 0
      %p321 = por %p319, %p320
      %p322 = scmp.ne.s32.totalorder %s311, %s314
      %p323 = scmp.eq.s32.totalorder %s25, 1
      %p324 = por %p322, %p323
      %p325 = scmp.ne.s32.totalorder %s314, %s315
      %p326 = scmp.eq.s32.totalorder %s25, 0
      %p327 = por %p325, %p326
      %p328 = scmp.ne.s32.totalorder %s314, %s315
      %p329 = scmp.eq.s32.totalorder %s26, 1
      %p330 = por %p328, %p329
      %p332 = scmp.ne.s32.totalorder %s315, %s331
      %p333 = scmp.eq.s32.totalorder %s26, 0
      %p334 = por %p332, %p333
      %p335 = scmp.le.s32.totalorder 1, %s20
      %p336 = scmp.lt.s32.totalorder %s20, 3
      %p337 = pnand %p335, %p336
      %p338 = pneg %p337
      // Predicated region
      $region9: #{tpu_custom_call.1} parent=5 // pred_check
        _
      $region10: #{tpu_custom_call.1} parent=5 // pred_check_branch
        %340 = sbr.rel (%p337) target = $region12
      $region11: #{tpu_custom_call.1} parent=5 // pred_region
        %s341 = ssub.s32 %s20, 1
        // Predicated region
        $region13: #{tpu_custom_call.1} parent=11 // pred_check
          %p342 = pneg %p41
        $region14: #{tpu_custom_call.1} parent=11 // pred_check_branch
          %344 = sbr.rel (%p342) target = $region16
        $region15: #{tpu_custom_call.1} parent=11 // pred_region
          _
        $region16: #{tpu_custom_call.1} parent=11 // pred_fallthru
          _
      $region12: #{tpu_custom_call.1} parent=5 // pred_fallthru
        _
      %p345 = scmp.lt.s32.totalorder %s20, 2
      // Predicated region
      $region17: #{tpu_custom_call.1} parent=5 // pred_check
        %p346 = pneg %p345
      $region18: #{tpu_custom_call.1} parent=5 // pred_check_branch
        %348 = sbr.rel (%p346) target = $region20
      $region19: #{tpu_custom_call.1} parent=5 // pred_region
        // Predicated region
        $region21: #{tpu_custom_call.1} parent=19 // pred_check
          %p349 = pneg %p61
        $region22: #{tpu_custom_call.1} parent=19 // pred_check_branch
          %351 = sbr.rel (%p349) target = $region24
        $region23: #{tpu_custom_call.1} parent=19 // pred_region
          %p352 = scmp.lt.s32.totalorder %s20, 1
          %s353 = scalar_select %p352, %s20, 1
          %s354 = smul.addr %s353, 8
          %s355 = smul.addr %s354, 8
          %s356 = scalar_lea.vmem %s1, %s355
        $region24: #{tpu_custom_call.1} parent=19 // pred_fallthru
          _
        // Predicated region
        $region25: #{tpu_custom_call.1} parent=19 // pred_check
          %p357 = pneg %p87
        $region26: #{tpu_custom_call.1} parent=19 // pred_check_branch
          %359 = sbr.rel (%p357) target = $region28
        $region27: #{tpu_custom_call.1} parent=19 // pred_region
          %p360 = scmp.lt.s32.totalorder %s20, 1
          %s361 = scalar_select %p360, %s20, 1
          %s362 = scalar_lea.vmem %s2, %s361
        $region28: #{tpu_custom_call.1} parent=19 // pred_fallthru
          _
        // Predicated region
        $region29: #{tpu_custom_call.1} parent=19 // pred_check
          %p363 = pneg %p113
        $region30: #{tpu_custom_call.1} parent=19 // pred_check_branch
          %365 = sbr.rel (%p363) target = $region32
        $region31: #{tpu_custom_call.1} parent=19 // pred_region
          %p366 = scmp.lt.s32.totalorder %s20, 1
          %s367 = scalar_select %p366, %s20, 1
          %s368 = smul.addr %s367, 8
          %s369 = smul.addr %s368, 8
          %s370 = scalar_lea.vmem %s3, %s369
        $region32: #{tpu_custom_call.1} parent=19 // pred_fallthru
          _
        // Predicated region
        $region33: #{tpu_custom_call.1} parent=19 // pred_check
          %p371 = pneg %p139
        $region34: #{tpu_custom_call.1} parent=19 // pred_check_branch
          %373 = sbr.rel (%p371) target = $region36
        $region35: #{tpu_custom_call.1} parent=19 // pred_region
          %p374 = scmp.lt.s32.totalorder %s20, 1
          %s375 = scalar_select %p374, %s20, 1
          %s376 = smul.addr %s375, 8
          %s377 = scalar_lea.vmem %s4, %s376
        $region36: #{tpu_custom_call.1} parent=19 // pred_fallthru
          _
        // Predicated region
        $region37: #{tpu_custom_call.1} parent=19 // pred_check
          %p378 = pneg %p165
        $region38: #{tpu_custom_call.1} parent=19 // pred_check_branch
          %380 = sbr.rel (%p378) target = $region40
        $region39: #{tpu_custom_call.1} parent=19 // pred_region
          %p381 = scmp.lt.s32.totalorder %s20, 1
          %s382 = scalar_select %p381, %s20, 1
          %s383 = smul.addr %s382, 4
          %s384 = smul.addr %s383, 8
          %s385 = scalar_lea.vmem %s5, %s384
        $region40: #{tpu_custom_call.1} parent=19 // pred_fallthru
          _
        // Predicated region
        $region41: #{tpu_custom_call.1} parent=19 // pred_check
          %p386 = pneg %p191
        $region42: #{tpu_custom_call.1} parent=19 // pred_check_branch
          %388 = sbr.rel (%p386) target = $region44
        $region43: #{tpu_custom_call.1} parent=19 // pred_region
          %p389 = scmp.lt.s32.totalorder %s20, 1
          %s390 = scalar_select %p389, %s20, 1
          %s391 = scalar_lea.vmem %s6, %s390
        $region44: #{tpu_custom_call.1} parent=19 // pred_fallthru
          _
        // Predicated region
        $region45: #{tpu_custom_call.1} parent=19 // pred_check
          %p392 = pneg %p217
        $region46: #{tpu_custom_call.1} parent=19 // pred_check_branch
          %394 = sbr.rel (%p392) target = $region48
        $region47: #{tpu_custom_call.1} parent=19 // pred_region
          %p395 = scmp.lt.s32.totalorder %s20, 1
          %s396 = scalar_select %p395, %s20, 1
          %s397 = smul.addr %s396, 8
          %s398 = smul.addr %s397, 8
          %s399 = scalar_lea.vmem %s7, %s398
        $region48: #{tpu_custom_call.1} parent=19 // pred_fallthru
          _
        // Predicated region
        $region49: #{tpu_custom_call.1} parent=19 // pred_check
          %p400 = pneg %p243
        $region50: #{tpu_custom_call.1} parent=19 // pred_check_branch
          %402 = sbr.rel (%p400) target = $region52
        $region51: #{tpu_custom_call.1} parent=19 // pred_region
          %p403 = scmp.lt.s32.totalorder %s20, 1
          %s404 = scalar_select %p403, %s20, 1
          %s405 = smul.addr %s404, 8
          %s406 = scalar_lea.vmem %s8, %s405
        $region52: #{tpu_custom_call.1} parent=19 // pred_fallthru
          _
        // Predicated region
        $region53: #{tpu_custom_call.1} parent=19 // pred_check
          %p407 = pneg %p269
        $region54: #{tpu_custom_call.1} parent=19 // pred_check_branch
          %409 = sbr.rel (%p407) target = $region56
        $region55: #{tpu_custom_call.1} parent=19 // pred_region
          %p410 = scmp.lt.s32.totalorder %s20, 1
          %s411 = scalar_select %p410, %s20, 1
          %s412 = smul.addr %s411, 4
          %s413 = smul.addr %s412, 8
          %s414 = scalar_lea.vmem %s9, %s413
        $region56: #{tpu_custom_call.1} parent=19 // pred_fallthru
          _
        // Predicated region
        $region57: #{tpu_custom_call.1} parent=19 // pred_check
          %p415 = pneg %p295
        $region58: #{tpu_custom_call.1} parent=19 // pred_check_branch
          %417 = sbr.rel (%p415) target = $region60
        $region59: #{tpu_custom_call.1} parent=19 // pred_region
          %p418 = scmp.lt.s32.totalorder %s20, 1
          %s419 = scalar_select %p418, %s20, 1
          %s420 = scalar_lea.vmem %s10, %s419
        $region60: #{tpu_custom_call.1} parent=19 // pred_fallthru
          _
      $region20: #{tpu_custom_call.1} parent=5 // pred_fallthru
        _
      %p421 = scmp.le.s32.totalorder 1, %s20
      %p422 = scmp.lt.s32.totalorder %s20, 3
      %p423 = pnand %p421, %p422
      %p424 = pneg %p423
      // Predicated region
      $region61: #{tpu_custom_call.1} parent=5 // pred_check
        _
      $region62: #{tpu_custom_call.1} parent=5 // pred_check_branch
        %426 = sbr.rel (%p423) target = $region64
      $region63: #{tpu_custom_call.1} parent=5 // pred_region
        %s427 = ssub.s32 %s20, 1
        %p428 = pneg %p41
        %p429 = pneg %p38
        %p430 = scmp.lt.s32.totalorder %s25, 1
        %s431 = scalar_select %p430, %s25, 1
        %s432 = smul.addr %s431, 8
        %s433 = smul.addr %s432, 8
        %s434 = scalar_lea.vmem %s1, %s433
        %p435 = pneg %p67
        %p436 = pneg %p64
        %p437 = scmp.lt.s32.totalorder %s25, 1
        %s438 = scalar_select %p437, %s25, 1
        %s439 = scalar_lea.vmem %s2, %s438
        %p440 = pneg %p93
        %p441 = pneg %p90
        %p442 = scmp.lt.s32.totalorder %s25, 1
        %s443 = scalar_select %p442, %s25, 1
        %s444 = smul.addr %s443, 8
        %s445 = smul.addr %s444, 8
        %s446 = scalar_lea.vmem %s3, %s445
        %p447 = pneg %p119
        %p448 = pneg %p116
        %p449 = scmp.lt.s32.totalorder %s25, 1
        %s450 = scalar_select %p449, %s25, 1
        %s451 = smul.addr %s450, 8
        %s452 = scalar_lea.vmem %s4, %s451
        %p453 = pneg %p145
        %p454 = pneg %p142
        %p455 = scmp.lt.s32.totalorder %s25, 1
        %s456 = scalar_select %p455, %s25, 1
        %s457 = smul.addr %s456, 4
        %s458 = smul.addr %s457, 8
        %s459 = scalar_lea.vmem %s5, %s458
        %p460 = pneg %p171
        %p461 = pneg %p168
        %p462 = scmp.lt.s32.totalorder %s25, 1
        %s463 = scalar_select %p462, %s25, 1
        %s464 = scalar_lea.vmem %s6, %s463
        %p465 = pneg %p197
        %p466 = pneg %p194
        %p467 = scmp.lt.s32.totalorder %s25, 1
        %s468 = scalar_select %p467, %s25, 1
        %s469 = smul.addr %s468, 8
        %s470 = smul.addr %s469, 8
        %s471 = scalar_lea.vmem %s7, %s470
        %p472 = pneg %p223
        %p473 = pneg %p220
        %p474 = scmp.lt.s32.totalorder %s25, 1
        %s475 = scalar_select %p474, %s25, 1
        %s476 = smul.addr %s475, 8
        %s477 = scalar_lea.vmem %s8, %s476
        %p478 = pneg %p249
        %p479 = pneg %p246
        %p480 = scmp.lt.s32.totalorder %s25, 1
        %s481 = scalar_select %p480, %s25, 1
        %s482 = smul.addr %s481, 4
        %s483 = smul.addr %s482, 8
        %s484 = scalar_lea.vmem %s9, %s483
        %p485 = pneg %p275
        %p486 = pneg %p272
        %p487 = scmp.lt.s32.totalorder %s25, 1
        %s488 = scalar_select %p487, %s25, 1
        %s489 = scalar_lea.vmem %s10, %s488
        %p490 = pneg %p301
        %p491 = pneg %p298
        %p492 = pneg %p327
        %p493 = pneg %p324
        %s494 = sand.u32 %s314, 1
        %s495 = scalar_lea.sflag [#allocation3], %s494
        %s496 = sand.u32 %s314, 1
        %s497 = smul.addr %s496, 16
        %s498 = scalar_lea.vmem [#allocation2], %s497
        %p499 = scmp.lt.s32.totalorder %s25, 1
        %s500 = scalar_select %p499, %s25, 1
        %s501 = smul.addr %s500, 8
        %s502 = smul.addr %s501, 8
        %s503 = scalar_lea.vmem %s1, %s502
        %p504 = scmp.lt.s32.totalorder %s25, 1
        %s505 = scalar_select %p504, %s25, 1
        %s506 = scalar_lea.vmem %s2, %s505
        %p507 = scmp.lt.s32.totalorder %s25, 1
        %s508 = scalar_select %p507, %s25, 1
        %s509 = smul.addr %s508, 8
        %s510 = smul.addr %s509, 8
        %s511 = scalar_lea.vmem %s3, %s510
        %p512 = scmp.lt.s32.totalorder %s25, 1
        %s513 = scalar_select %p512, %s25, 1
        %s514 = smul.addr %s513, 8
        %s515 = scalar_lea.vmem %s4, %s514
        %p516 = scmp.lt.s32.totalorder %s25, 1
        %s517 = scalar_select %p516, %s25, 1
        %s518 = smul.addr %s517, 4
        %s519 = smul.addr %s518, 8
        %s520 = scalar_lea.vmem %s5, %s519
        %p521 = scmp.lt.s32.totalorder %s25, 1
        %s522 = scalar_select %p521, %s25, 1
        %s523 = scalar_lea.vmem %s6, %s522
        %p524 = scmp.lt.s32.totalorder %s25, 1
        %s525 = scalar_select %p524, %s25, 1
        %s526 = smul.addr %s525, 8
        %s527 = smul.addr %s526, 8
        %s528 = scalar_lea.vmem %s7, %s527
        %p529 = scmp.lt.s32.totalorder %s25, 1
        %s530 = scalar_select %p529, %s25, 1
        %s531 = smul.addr %s530, 8
        %s532 = scalar_lea.vmem %s8, %s531
        %p533 = scmp.lt.s32.totalorder %s25, 1
        %s534 = scalar_select %p533, %s25, 1
        %s535 = smul.addr %s534, 4
        %s536 = smul.addr %s535, 8
        %s537 = scalar_lea.vmem %s9, %s536
        %p538 = scmp.lt.s32.totalorder %s25, 1
        %s539 = scalar_select %p538, %s25, 1
        %s540 = scalar_lea.vmem %s10, %s539
        %v542 = vlaneseq
        %v543 = vshrl.u32 %v542, 7
        %v544 = vadd.s32 %v543, 8
        %vm545 = vcmp.lt.s32.totalorder %v543, 0
        %v546 = vsub.s32 0, %v543
        %v547 = vsel %vm545, %v546, %v543
        %v548 = vshrl.u32 %v547, 3
        %v549 = vand.u32 %v547, 7
        %v550 = vsub.s32 0, %v549
        %v551 = vsel %vm545, %v550, %v549
        %vm552 = vcmp.lt.s32.totalorder %v544, 0
        %v553 = vsub.s32 0, %v544
        %v554 = vsel %vm552, %v553, %v544
        %v555 = vshrl.u32 %v554, 3
        %v556 = vand.u32 %v554, 7
        %v557 = vsub.s32 0, %v556
        %v558 = vsel %vm552, %v557, %v556
        %vm559 = vcmp.ne.s32.totalorder %v551, 0
        %vm560 = vcmp.ne.s32.totalorder %v558, 0
        %vm561 = vcmp.lt.s32.totalorder %v551, 0
        %vm562 = vcmp.lt.s32.totalorder %v558, 0
        %vm563 = vmand %vm561, %vm559
        %vm564 = vmand %vm562, %vm560
        %v565 = vadd.s32 %v551, 8
        %v566 = vadd.s32 %v558, 8
        %v567 = vsel %vm563, %v565, %v551
        %v568 = vsel %vm564, %v566, %v558
        %v569 = vld [vmem:[%s0] sm:$0xff]
        %v570 = vld [vmem:[%s0 + $0x8] sm:$0xff]
        %v571 = vld [vmem:[%s503] sm:$0xff]
        %v572 = vld [vmem:[%s503 + $0x8] sm:$0xff]
        %v573 = vld [vmem:[%s503 + $0x10] sm:$0xff]
        %v574 = vld [vmem:[%s503 + $0x18] sm:$0xff]
        %v575 = vld [vmem:[%s503 + $0x20] sm:$0xff]
        %v576 = vld [vmem:[%s503 + $0x28] sm:$0xff]
        %v577 = vld [vmem:[%s503 + $0x30] sm:$0xff]
        %v578 = vld [vmem:[%s503 + $0x38] sm:$0xff]
        %v579 = vpack.c.bf16 %v570, %v569
        %v580 = vpack.c.bf16 %v572, %v571
        %v581 = vpack.c.bf16 %v574, %v573
        %v582 = vpack.c.bf16 %v576, %v575
        %v583 = vpack.c.bf16 %v578, %v577
        %v584 = vld [vmem:[%s506] sm:$0x1]
        %v586 = vlaneseq
        %v587 = vshrl.u32 %v586, 7
        %v588 = vsub.s32 0, %v587
        %v589 = vrot.slane %v584, %v588
        %vm591 = vcmask 523264
        %v593 = vsel %vm591, %v579, 0
        %595 = vmatprep.subr.bf16.mxu0 0
        %596 = vmatpush1.bf16.msra.mxu0 0
        %597 = vmatprep.subr.bf16.mxu0 0
        %598 = vmatpush1.bf16.msra.mxu0 0
        %599 = vmatprep.subr.bf16.mxu0 0
        %600 = vmatpush1.bf16.msra.mxu0 0
        %601 = vmatprep.subr.bf16.mxu0 0
        %602 = vmatpush1.bf16.msra.mxu0 0
        %603 = vmatprep.subr.bf16.mxu0 0
        %604 = vmatpush1.bf16.msra.mxu0 %v583
        %605 = vmatprep.subr.bf16.mxu0 0
        %606 = vmatpush1.bf16.msra.mxu0 %v582
        %607 = vmatprep.subr.bf16.mxu0 0
        %608 = vmatpush1.bf16.msra.mxu0 %v581
        %609 = vmatprep.subr.bf16.mxu0 0
        %610 = vmatpush1.bf16.msra.mxu0 %v580
        %611 = vmatprep.subr.bf16.mxu0 0
        %612 = vmatpush2.bf16.msra.mxu0 0
        %613 = vmatprep.subr.bf16.mxu0 0
        %614 = vmatpush2.bf16.msra.mxu0 0
        %615 = vmatprep.subr.bf16.mxu0 0
        %616 = vmatpush2.bf16.msra.mxu0 0
        %617 = vmatprep.subr.bf16.mxu0 0
        %618 = vmatpush2.bf16.msra.mxu0 0
        %619 = vmatprep.subr.bf16.mxu0 0
        %620 = vmatpush2.bf16.msra.mxu0 0
        %621 = vmatprep.subr.bf16.mxu0 0
        %622 = vmatpush2.bf16.msra.mxu0 0
        %623 = vmatprep.subr.bf16.mxu0 0
        %624 = vmatpush2.bf16.msra.mxu0 0
        %625 = vmatprep.subr.bf16.mxu0 0
        %626 = vmatpush2.bf16.msra.mxu0 0
        %627 = vmatprep.mubr.bf16.mxu0 0
        %628 = vmatmul.mubr.bf16.gmra.mxu0 %v593
        %v629 = vpop.f32.mrf.mxu0
        %v630 = vadd.f32 %v589, %v629
        %v631 = vpop.f32.mrf.mxu0
        %v632 = vpop.f32.mrf.mxu0
        %v633 = vadd.f32 %v589, %v632
        %v634 = vpop.f32.mrf.mxu0
        %635 = vdwg.mxu0
        %v636 = vmax.f32 %v630, 0.0
        %v637 = vmax.f32 %v633, 0.0
        %v638 = vld [vmem:[%s511] sm:$0xff]
        %v639 = vld [vmem:[%s511 + $0x8] sm:$0xff]
        %v640 = vld [vmem:[%s511 + $0x10] sm:$0xff]
        %v641 = vld [vmem:[%s511 + $0x18] sm:$0xff]
        %v642 = vld [vmem:[%s511 + $0x20] sm:$0xff]
        %v643 = vld [vmem:[%s511 + $0x28] sm:$0xff]
        %v644 = vld [vmem:[%s511 + $0x30] sm:$0xff]
        %v645 = vld [vmem:[%s511 + $0x38] sm:$0xff]
        %v646 = vpack.c.bf16 %v637, %v636
        %v647 = vpack.c.bf16 %v639, %v638
        %v648 = vpack.c.bf16 %v641, %v640
        %v649 = vpack.c.bf16 %v643, %v642
        %v650 = vpack.c.bf16 %v645, %v644
        %v652 = vsel %vm591, %v646, 0
        %654 = vmatprep.subr.bf16.mxu0 0
        %655 = vmatpush1.bf16.msra.mxu0 0
        %656 = vmatprep.subr.bf16.mxu0 0
        %657 = vmatpush1.bf16.msra.mxu0 0
        %658 = vmatprep.subr.bf16.mxu0 0
        %659 = vmatpush1.bf16.msra.mxu0 0
        %660 = vmatprep.subr.bf16.mxu0 0
        %661 = vmatpush1.bf16.msra.mxu0 0
        %662 = vmatprep.subr.bf16.mxu0 0
        %663 = vmatpush1.bf16.msra.mxu0 %v650
        %664 = vmatprep.subr.bf16.mxu0 0
        %665 = vmatpush1.bf16.msra.mxu0 %v649
        %666 = vmatprep.subr.bf16.mxu0 0
        %667 = vmatpush1.bf16.msra.mxu0 %v648
        %668 = vmatprep.subr.bf16.mxu0 0
        %669 = vmatpush1.bf16.msra.mxu0 %v647
        %670 = vmatprep.subr.bf16.mxu0 0
        %671 = vmatpush2.bf16.msra.mxu0 0
        %672 = vmatprep.subr.bf16.mxu0 0
        %673 = vmatpush2.bf16.msra.mxu0 0
        %674 = vmatprep.subr.bf16.mxu0 0
        %675 = vmatpush2.bf16.msra.mxu0 0
        %676 = vmatprep.subr.bf16.mxu0 0
        %677 = vmatpush2.bf16.msra.mxu0 0
        %678 = vmatprep.subr.bf16.mxu0 0
        %679 = vmatpush2.bf16.msra.mxu0 0
        %680 = vmatprep.subr.bf16.mxu0 0
        %681 = vmatpush2.bf16.msra.mxu0 0
        %682 = vmatprep.subr.bf16.mxu0 0
        %683 = vmatpush2.bf16.msra.mxu0 0
        %684 = vmatprep.subr.bf16.mxu0 0
        %685 = vmatpush2.bf16.msra.mxu0 0
        %686 = vmatprep.mubr.bf16.mxu0 0
        %687 = vmatmul.mubr.bf16.gmra.mxu0 %v652
        %v688 = vpop.f32.mrf.mxu0
        %v689 = vadd.f32 0.0, %v688
        %v690 = vpop.f32.mrf.mxu0
        %v691 = vpop.f32.mrf.mxu0
        %v692 = vadd.f32 0.0, %v691
        %v693 = vpop.f32.mrf.mxu0
        %694 = vdwg.mxu0
        %v695 = vrot.slane %v689, 6
        %v696 = vrot.slane %v692, 6
        %vm697 = vcmp.lt.s32.totalorder %v543, 2
        %v698 = vsel %vm697, %v695, %v696
        %v699 = vsel %vm697, %v696, %v695
        %vm700 = vcmp.ge.s32.totalorder %v567, 2
        %vm701 = vcmp.ge.s32.totalorder %v568, 2
        %v702 = vsel %vm700, 1, 0
        %v703 = vsel %vm701, 1, 0
        %vm704 = vcmp.eq.s32.totalorder %v702, 1
        %vm705 = vcmp.eq.s32.totalorder %v703, 1
        %v706 = vsel %vm704, %v699, 0.0
        %v707 = vsel %vm705, %v698, 0.0
        %v708 = vld [vmem:[%s515] sm:$0x1]
        %v709 = vlaneseq
        %v710 = vshrl.u32 %v709, 7
        %v711 = vsub.s32 0, %v710
        %v712 = vrot.slane %v708, %v711
        %v713 = vmul.f32 %v706, %v712
        %v714 = vmul.f32 %v707, %v712
        %v715 = vadd.f32 %v689, %v713
        %v716 = vadd.f32 %v692, %v714
        %v717 = vrot.slane %v689, 7
        %v718 = vrot.slane %v692, 7
        %vm719 = vcmp.lt.s32.totalorder %v543, 1
        %v720 = vsel %vm719, %v717, %v718
        %v721 = vsel %vm719, %v718, %v717
        %vm722 = vcmp.ge.s32.totalorder %v567, 1
        %vm723 = vcmp.ge.s32.totalorder %v568, 1
        %v724 = vsel %vm722, 1, 0
        %v725 = vsel %vm723, 1, 0
        %vm726 = vcmp.eq.s32.totalorder %v724, 1
        %vm727 = vcmp.eq.s32.totalorder %v725, 1
        %v728 = vsel %vm726, %v721, 0.0
        %v729 = vsel %vm727, %v720, 0.0
        %v730 = vld [vmem:[%s515 + $0x1] sm:$0x1]
        %v731 = vlaneseq
        %v732 = vshrl.u32 %v731, 7
        %v733 = vsub.s32 0, %v732
        %v734 = vrot.slane %v730, %v733
        %v735 = vmul.f32 %v728, %v734
        %v736 = vmul.f32 %v729, %v734
        %v737 = vadd.f32 %v715, %v735
        %v738 = vadd.f32 %v716, %v736
        %v739 = vld [vmem:[%s515 + $0x2] sm:$0x1]
        %v740 = vlaneseq
        %v741 = vshrl.u32 %v740, 7
        %v742 = vsub.s32 0, %v741
        %v743 = vrot.slane %v739, %v742
        %v744 = vmul.f32 %v689, %v743
        %v745 = vmul.f32 %v692, %v743
        %v746 = vadd.f32 %v737, %v744
        %v747 = vadd.f32 %v738, %v745
        %v748 = vrot.slane %v689, 1
        %v749 = vrot.slane %v692, 1
        %vm750 = vcmp.lt.s32.totalorder %v543, 7
        %v751 = vsel %vm750, %v748, %v749
        %v752 = vsel %vm750, %v749, %v748
        %vm753 = vcmp.lt.s32.totalorder %v567, 7
        %vm754 = vcmp.lt.s32.totalorder %v568, 7
        %v755 = vsel %vm753, 1, 0
        %v756 = vsel %vm754, 1, 0
        %vm757 = vcmp.eq.s32.totalorder %v755, 1
        %vm758 = vcmp.eq.s32.totalorder %v756, 1
        %v759 = vsel %vm757, %v751, 0.0
        %v760 = vsel %vm758, %v752, 0.0
        %v761 = vld [vmem:[%s515 + $0x3] sm:$0x1]
        %v762 = vlaneseq
        %v763 = vshrl.u32 %v762, 7
        %v764 = vsub.s32 0, %v763
        %v765 = vrot.slane %v761, %v764
        %v766 = vmul.f32 %v759, %v765
        %v767 = vmul.f32 %v760, %v765
        %v768 = vadd.f32 %v746, %v766
        %v769 = vadd.f32 %v747, %v767
        %v770 = vrot.slane %v689, 2
        %v771 = vrot.slane %v692, 2
        %vm772 = vcmp.lt.s32.totalorder %v543, 6
        %v773 = vsel %vm772, %v770, %v771
        %v774 = vsel %vm772, %v771, %v770
        %vm775 = vcmp.lt.s32.totalorder %v567, 6
        %vm776 = vcmp.lt.s32.totalorder %v568, 6
        %v777 = vsel %vm775, 1, 0
        %v778 = vsel %vm776, 1, 0
        %vm779 = vcmp.eq.s32.totalorder %v777, 1
        %vm780 = vcmp.eq.s32.totalorder %v778, 1
        %v781 = vsel %vm779, %v773, 0.0
        %v782 = vsel %vm780, %v774, 0.0
        %v783 = vld [vmem:[%s515 + $0x4] sm:$0x1]
        %v784 = vlaneseq
        %v785 = vshrl.u32 %v784, 7
        %v786 = vsub.s32 0, %v785
        %v787 = vrot.slane %v783, %v786
        %v788 = vmul.f32 %v781, %v787
        %v789 = vmul.f32 %v782, %v787
        %v790 = vadd.f32 %v768, %v788
        %v791 = vadd.f32 %v769, %v789
        %v792 = vld [vmem:[%s520] sm:$0xff]
        %v793 = vld [vmem:[%s520 + $0x8] sm:$0xff]
        %v794 = vld [vmem:[%s520 + $0x10] sm:$0xff]
        %v795 = vld [vmem:[%s520 + $0x18] sm:$0xff]
        %v796 = vpack.c.bf16 %v791, %v790
        %v797 = vpack.c.bf16 %v793, %v792
        %v798 = vpack.c.bf16 %v795, %v794
        %v799 = vld [vmem:[%s523] sm:$0x1]
        %v801 = vlaneseq
        %v802 = vshrl.u32 %v801, 7
        %v803 = vsub.s32 0, %v802
        %v804 = vrot.slane %v799, %v803
        %vm806 = vcmask 261120
        %v808 = vsel %vm806, %v796, 0
        %810 = vmatprep.subr.bf16.mxu0 0
        %811 = vmatpush1.bf16.msra.mxu0 0
        %812 = vmatprep.subr.bf16.mxu0 0
        %813 = vmatpush1.bf16.msra.mxu0 0
        %814 = vmatprep.subr.bf16.mxu0 0
        %815 = vmatpush1.bf16.msra.mxu0 0
        %816 = vmatprep.subr.bf16.mxu0 0
        %817 = vmatpush1.bf16.msra.mxu0 0
        %818 = vmatprep.subr.bf16.mxu0 0
        %819 = vmatpush1.bf16.msra.mxu0 0
        %820 = vmatprep.subr.bf16.mxu0 0
        %821 = vmatpush1.bf16.msra.mxu0 0
        %822 = vmatprep.subr.bf16.mxu0 0
        %823 = vmatpush1.bf16.msra.mxu0 %v798
        %824 = vmatprep.subr.bf16.mxu0 0
        %825 = vmatpush1.bf16.msra.mxu0 %v797
        %826 = vmatprep.subr.bf16.mxu0 0
        %827 = vmatpush2.bf16.msra.mxu0 0
        %828 = vmatprep.subr.bf16.mxu0 0
        %829 = vmatpush2.bf16.msra.mxu0 0
        %830 = vmatprep.subr.bf16.mxu0 0
        %831 = vmatpush2.bf16.msra.mxu0 0
        %832 = vmatprep.subr.bf16.mxu0 0
        %833 = vmatpush2.bf16.msra.mxu0 0
        %834 = vmatprep.subr.bf16.mxu0 0
        %835 = vmatpush2.bf16.msra.mxu0 0
        %836 = vmatprep.subr.bf16.mxu0 0
        %837 = vmatpush2.bf16.msra.mxu0 0
        %838 = vmatprep.subr.bf16.mxu0 0
        %839 = vmatpush2.bf16.msra.mxu0 0
        %840 = vmatprep.subr.bf16.mxu0 0
        %841 = vmatpush2.bf16.msra.mxu0 0
        %842 = vmatprep.mubr.bf16.mxu0 0
        %843 = vmatmul.mubr.bf16.gmra.mxu0 %v808
        %v844 = vpop.f32.mrf.mxu0
        %v845 = vadd.f32 %v804, %v844
        %v846 = vpop.f32.mrf.mxu0
        %v847 = vpop.f32.mrf.mxu0
        %v848 = vadd.f32 %v804, %v847
        %v849 = vpop.f32.mrf.mxu0
        %850 = vdwg.mxu0
        %v851 = vmax.f32 %v845, 0.0
        %v852 = vmax.f32 %v848, 0.0
        %v853 = vld [vmem:[%s528] sm:$0xff]
        %v854 = vld [vmem:[%s528 + $0x8] sm:$0xff]
        %v855 = vld [vmem:[%s528 + $0x10] sm:$0xff]
        %v856 = vld [vmem:[%s528 + $0x18] sm:$0xff]
        %v857 = vld [vmem:[%s528 + $0x20] sm:$0xff]
        %v858 = vld [vmem:[%s528 + $0x28] sm:$0xff]
        %v859 = vld [vmem:[%s528 + $0x30] sm:$0xff]
        %v860 = vld [vmem:[%s528 + $0x38] sm:$0xff]
        %v861 = vpack.c.bf16 %v852, %v851
        %v862 = vpack.c.bf16 %v854, %v853
        %v863 = vpack.c.bf16 %v856, %v855
        %v864 = vpack.c.bf16 %v858, %v857
        %v865 = vpack.c.bf16 %v860, %v859
        %v867 = vsel %vm591, %v861, 0
        %869 = vmatprep.subr.bf16.mxu0 0
        %870 = vmatpush1.bf16.msra.mxu0 0
        %871 = vmatprep.subr.bf16.mxu0 0
        %872 = vmatpush1.bf16.msra.mxu0 0
        %873 = vmatprep.subr.bf16.mxu0 0
        %874 = vmatpush1.bf16.msra.mxu0 0
        %875 = vmatprep.subr.bf16.mxu0 0
        %876 = vmatpush1.bf16.msra.mxu0 0
        %877 = vmatprep.subr.bf16.mxu0 0
        %878 = vmatpush1.bf16.msra.mxu0 %v865
        %879 = vmatprep.subr.bf16.mxu0 0
        %880 = vmatpush1.bf16.msra.mxu0 %v864
        %881 = vmatprep.subr.bf16.mxu0 0
        %882 = vmatpush1.bf16.msra.mxu0 %v863
        %883 = vmatprep.subr.bf16.mxu0 0
        %884 = vmatpush1.bf16.msra.mxu0 %v862
        %885 = vmatprep.subr.bf16.mxu0 0
        %886 = vmatpush2.bf16.msra.mxu0 0
        %887 = vmatprep.subr.bf16.mxu0 0
        %888 = vmatpush2.bf16.msra.mxu0 0
        %889 = vmatprep.subr.bf16.mxu0 0
        %890 = vmatpush2.bf16.msra.mxu0 0
        %891 = vmatprep.subr.bf16.mxu0 0
        %892 = vmatpush2.bf16.msra.mxu0 0
        %893 = vmatprep.subr.bf16.mxu0 0
        %894 = vmatpush2.bf16.msra.mxu0 0
        %895 = vmatprep.subr.bf16.mxu0 0
        %896 = vmatpush2.bf16.msra.mxu0 0
        %897 = vmatprep.subr.bf16.mxu0 0
        %898 = vmatpush2.bf16.msra.mxu0 0
        %899 = vmatprep.subr.bf16.mxu0 0
        %900 = vmatpush2.bf16.msra.mxu0 0
        %901 = vmatprep.mubr.bf16.mxu0 0
        %902 = vmatmul.mubr.bf16.gmra.mxu0 %v867
        %v903 = vpop.f32.mrf.mxu0
        %v904 = vadd.f32 0.0, %v903
        %v905 = vpop.f32.mrf.mxu0
        %v906 = vpop.f32.mrf.mxu0
        %v907 = vadd.f32 0.0, %v906
        %v908 = vpop.f32.mrf.mxu0
        %909 = vdwg.mxu0
        %v910 = vrot.slane %v904, 6
        %v911 = vrot.slane %v907, 6
        %v912 = vsel %vm697, %v910, %v911
        %v913 = vsel %vm697, %v911, %v910
        %v914 = vsel %vm704, %v913, 0.0
        %v915 = vsel %vm705, %v912, 0.0
        %v916 = vld [vmem:[%s532] sm:$0x1]
        %v917 = vlaneseq
        %v918 = vshrl.u32 %v917, 7
        %v919 = vsub.s32 0, %v918
        %v920 = vrot.slane %v916, %v919
        %v921 = vmul.f32 %v914, %v920
        %v922 = vmul.f32 %v915, %v920
        %v923 = vadd.f32 %v904, %v921
        %v924 = vadd.f32 %v907, %v922
        %v925 = vrot.slane %v904, 7
        %v926 = vrot.slane %v907, 7
        %v927 = vsel %vm719, %v925, %v926
        %v928 = vsel %vm719, %v926, %v925
        %v929 = vsel %vm726, %v928, 0.0
        %v930 = vsel %vm727, %v927, 0.0
        %v931 = vld [vmem:[%s532 + $0x1] sm:$0x1]
        %v932 = vlaneseq
        %v933 = vshrl.u32 %v932, 7
        %v934 = vsub.s32 0, %v933
        %v935 = vrot.slane %v931, %v934
        %v936 = vmul.f32 %v929, %v935
        %v937 = vmul.f32 %v930, %v935
        %v938 = vadd.f32 %v923, %v936
        %v939 = vadd.f32 %v924, %v937
        %v940 = vld [vmem:[%s532 + $0x2] sm:$0x1]
        %v941 = vlaneseq
        %v942 = vshrl.u32 %v941, 7
        %v943 = vsub.s32 0, %v942
        %v944 = vrot.slane %v940, %v943
        %v945 = vmul.f32 %v904, %v944
        %v946 = vmul.f32 %v907, %v944
        %v947 = vadd.f32 %v938, %v945
        %v948 = vadd.f32 %v939, %v946
        %v949 = vrot.slane %v904, 1
        %v950 = vrot.slane %v907, 1
        %v951 = vsel %vm750, %v949, %v950
        %v952 = vsel %vm750, %v950, %v949
        %v953 = vsel %vm757, %v951, 0.0
        %v954 = vsel %vm758, %v952, 0.0
        %v955 = vld [vmem:[%s532 + $0x3] sm:$0x1]
        %v956 = vlaneseq
        %v957 = vshrl.u32 %v956, 7
        %v958 = vsub.s32 0, %v957
        %v959 = vrot.slane %v955, %v958
        %v960 = vmul.f32 %v953, %v959
        %v961 = vmul.f32 %v954, %v959
        %v962 = vadd.f32 %v947, %v960
        %v963 = vadd.f32 %v948, %v961
        %v964 = vrot.slane %v904, 2
        %v965 = vrot.slane %v907, 2
        %v966 = vsel %vm772, %v964, %v965
        %v967 = vsel %vm772, %v965, %v964
        %v968 = vsel %vm779, %v966, 0.0
        %v969 = vsel %vm780, %v967, 0.0
        %v970 = vld [vmem:[%s532 + $0x4] sm:$0x1]
        %v971 = vlaneseq
        %v972 = vshrl.u32 %v971, 7
        %v973 = vsub.s32 0, %v972
        %v974 = vrot.slane %v970, %v973
        %v975 = vmul.f32 %v968, %v974
        %v976 = vmul.f32 %v969, %v974
        %v977 = vadd.f32 %v962, %v975
        %v978 = vadd.f32 %v963, %v976
        %v979 = vadd.f32 %v977, %v790
        %v980 = vadd.f32 %v978, %v791
        %v981 = vld [vmem:[%s537] sm:$0xff]
        %v982 = vld [vmem:[%s537 + $0x8] sm:$0xff]
        %v983 = vld [vmem:[%s537 + $0x10] sm:$0xff]
        %v984 = vld [vmem:[%s537 + $0x18] sm:$0xff]
        %v985 = vpack.c.bf16 %v980, %v979
        %v986 = vpack.c.bf16 %v982, %v981
        %v987 = vpack.c.bf16 %v984, %v983
        %v988 = vld [vmem:[%s540] sm:$0x1]
        %v990 = vlaneseq
        %v991 = vshrl.u32 %v990, 7
        %v992 = vsub.s32 0, %v991
        %v993 = vrot.slane %v988, %v992
        %v996 = vsel %vm806, %v985, 0
        %998 = vmatprep.subr.bf16.mxu0 0
        %999 = vmatpush1.bf16.msra.mxu0 0
        %1000 = vmatprep.subr.bf16.mxu0 0
        %1001 = vmatpush1.bf16.msra.mxu0 0
        %1002 = vmatprep.subr.bf16.mxu0 0
        %1003 = vmatpush1.bf16.msra.mxu0 0
        %1004 = vmatprep.subr.bf16.mxu0 0
        %1005 = vmatpush1.bf16.msra.mxu0 0
        %1006 = vmatprep.subr.bf16.mxu0 0
        %1007 = vmatpush1.bf16.msra.mxu0 0
        %1008 = vmatprep.subr.bf16.mxu0 0
        %1009 = vmatpush1.bf16.msra.mxu0 0
        %1010 = vmatprep.subr.bf16.mxu0 0
        %1011 = vmatpush1.bf16.msra.mxu0 %v987
        %1012 = vmatprep.subr.bf16.mxu0 0
        %1013 = vmatpush1.bf16.msra.mxu0 %v986
        %1014 = vmatprep.subr.bf16.mxu0 0
        %1015 = vmatpush2.bf16.msra.mxu0 0
        %1016 = vmatprep.subr.bf16.mxu0 0
        %1017 = vmatpush2.bf16.msra.mxu0 0
        %1018 = vmatprep.subr.bf16.mxu0 0
        %1019 = vmatpush2.bf16.msra.mxu0 0
        %1020 = vmatprep.subr.bf16.mxu0 0
        %1021 = vmatpush2.bf16.msra.mxu0 0
        %1022 = vmatprep.subr.bf16.mxu0 0
        %1023 = vmatpush2.bf16.msra.mxu0 0
        %1024 = vmatprep.subr.bf16.mxu0 0
        %1025 = vmatpush2.bf16.msra.mxu0 0
        %1026 = vmatprep.subr.bf16.mxu0 0
        %1027 = vmatpush2.bf16.msra.mxu0 0
        %1028 = vmatprep.subr.bf16.mxu0 0
        %1029 = vmatpush2.bf16.msra.mxu0 0
        %1030 = vmatprep.mubr.bf16.mxu0 0
        %1031 = vmatmul.mubr.bf16.gmra.mxu0 %v996
        %v1032 = vpop.f32.mrf.mxu0
        %v1033 = vadd.f32 %v993, %v1032
        %v1034 = vpop.f32.mrf.mxu0
        %v1035 = vpop.f32.mrf.mxu0
        %v1036 = vadd.f32 %v993, %v1035
        %v1037 = vpop.f32.mrf.mxu0
        %1038 = vdwg.mxu0
        %1039 = vst [vmem:[%s498] sm:$0xff] %v1033
        %1040 = vst [vmem:[%s498 + $0x8] sm:$0xff] %v1036
        %s1041 = sand.u32 %s314, 1
        %s1042 = scalar_lea.sflag [#allocation3], %s1041
        %s1043 = sand.u32 %s314, 1
        %s1044 = smul.addr %s1043, 16
        %s1045 = scalar_lea.vmem [#allocation2], %s1044
        // Predicated region
        $region65: #{tpu_custom_call.1} parent=63 // pred_check
          %p1046 = pneg %p324
        $region66: #{tpu_custom_call.1} parent=63 // pred_check_branch
          %1048 = sbr.rel (%p1046) target = $region68
        $region67: #{tpu_custom_call.1} parent=63 // pred_region
          %s1050 = ssub.s32 256, 256
          %1051 = vsyncadd %s1042, %s1050
          %s1052 = smul.addr %s25, 2
          %s1053 = smul.addr %s1052, 128
          %s1054 = scalar_lea.hbm %s11, %s1053
          %s1055 = sshll.u32 %s1045, 4
          %s1056 = int_to_ptr.vmem [resolvable:$true] %s1055
          %1061 = dma.vmem_to_hbm [thread:$0]  %s1056, 256, %s1054, %s1042, 128, 128, 8
        $region68: #{tpu_custom_call.1} parent=63 // pred_fallthru
          _
      $region64: #{tpu_custom_call.1} parent=5 // pred_fallthru
        _
      %p1062 = scmp.le.s32.totalorder 2, %s20
      // Predicated region
      $region69: #{tpu_custom_call.1} parent=5 // pred_check
        %p1063 = pneg %p1062
      $region70: #{tpu_custom_call.1} parent=5 // pred_check_branch
        %1065 = sbr.rel (%p1063) target = $region72
      $region71: #{tpu_custom_call.1} parent=5 // pred_region
        %s1066 = ssub.s32 %s20, 2
        // Predicated region
        $region73: #{tpu_custom_call.1} parent=71 // pred_check
          %p1067 = pneg %p330
        $region74: #{tpu_custom_call.1} parent=71 // pred_check_branch
          %1069 = sbr.rel (%p1067) target = $region76
        $region75: #{tpu_custom_call.1} parent=71 // pred_region
          %s1070 = sand.u32 %s315, 1
          %s1071 = scalar_lea.sflag [#allocation3], %s1070
          %s1072 = sand.u32 %s315, 1
          %s1073 = smul.addr %s1072, 16
          %s1074 = scalar_lea.vmem [#allocation2], %s1073
          %1075 = dma.done %s1071, 256
        $region76: #{tpu_custom_call.1} parent=71 // pred_fallthru
          _
      $region72: #{tpu_custom_call.1} parent=5 // pred_fallthru
        _
    $region6: #{tpu_custom_call.1} parent=1 // loop_footer
      %s24 = sadd.s32 1, %s20
    $region7: #{tpu_custom_call.1} parent=1 // loop_footer_branch
      %19 = sbr.rel target = $region3
    $region8: #{tpu_custom_call.1} parent=1 // loop_exit
      _
    %1076 = vsyncpa [#allocation3], 1
    %s1077 = scalar_lea.sflag [#allocation3], 1
    %1078 = vsyncpa %s1077, 1

</llo_original>
